<compile_context>
chip_gen: v7x
topology: tpu7x:2x2x1
jax: 0.10.0
libtpu: 0.0.40
codegen_flags: <defaults>
</compile_context>

<pallas_src>
import functools

import jax
import jax.numpy as jnp
import numpy as np
from jax.experimental import pallas as pl
from jax.experimental.pallas import tpu as pltpu


def _lstm_kernel(x_ref, wih0_ref, b0_ref, wbig_ref, b1_ref,
                 wfc_ref, bfc_ref, out_ref,
                 *, hidden_size, seq_len, batch):
    """Whole forward pass in one gridless kernel (everything fits in VMEM).

    x_ref is time-major, batch-padded and flattened: (T * B, I) where rows
    [t*B:(t+1)*B] hold timestep t.
    wbig_ref is the lane-concatenated (H, 12H) matrix [Whh0 | Wih1 | Whh1].
    """
    H = hidden_size
    T = seq_len
    B = batch  # padded to a multiple of 8 (sublane tile)
    f32 = jnp.float32

    # Lane mask selecting the "g" gate block (PyTorch gate order: i, f, g, o),
    # built once for the stacked (2B, 4H) gate tile.
    lane = jax.lax.broadcasted_iota(jnp.int32, (2 * B, 4 * H), 1)
    g_mask = (lane >= 2 * H) & (lane < 3 * H)

    def activations(gates, mask):
        # One tanh pass for all four gates: sigmoid(x) = 0.5 * (1 + tanh(x / 2)).
        scaled = jnp.where(mask, gates, 0.5 * gates)
        t = jnp.tanh(scaled)
        return jnp.where(mask, t, 0.5 * t + 0.5)

    def cell(act, c):
        i = act[:, 0:H]
        f = act[:, H:2 * H]
        g = act[:, 2 * H:3 * H]
        o = act[:, 3 * H:4 * H]
        c_new = f * c + i * g
        h_new = o * jnp.tanh(c_new)
        return h_new, c_new

    # ---- Hoisted layer-0 input projection over the whole sequence (one MXU pass) ----
    gx0 = jnp.dot(x_ref[...], wih0_ref[...],
                  preferred_element_type=f32) + b0_ref[...]        # (T*B, 4H)

    b1 = b1_ref[...]
    wbig = wbig_ref[...]                                           # (H, 12H)

    # ---- s = 0: layer 0 only; all states are zero so the recurrent term vanishes ----
    act0 = activations(gx0[0:B, :], g_mask[0:B, :])
    h0, c0 = cell(act0, jnp.zeros((B, H), f32))
    h = jnp.concatenate([h0, jnp.zeros((B, H), f32)], axis=0)      # rows 0:B = layer0
    c = jnp.concatenate([c0, jnp.zeros((B, H), f32)], axis=0)      # rows B:2B = layer1

    # ---- Wavefront steps s = 1..T: layer0 @ t=s and layer1 @ t=s-1 in one matmul ----
    for s in range(1, T + 1):  # static, small T -> unrolled
        big = jnp.dot(h, wbig, preferred_element_type=f32)         # (2B, 12H)
        # Layer-0 gates for t=s.  At s == T the layer-0 half is dead (never read
        # again); reuse a valid gx0 block so indexing stays in range.
        t0 = min(s, T - 1)
        gates0 = gx0[t0 * B:(t0 + 1) * B, :] + big[0:B, 0:4 * H]
        # Layer-1 gates for t=s-1: input proj from h0_{s-1} (rows 0:B, lanes 4H:8H)
        # plus recurrence from h1_{s-2} (rows B:2B, lanes 8H:12H).
        gates1 = big[0:B, 4 * H:8 * H] + b1 + big[B:2 * B, 8 * H:12 * H]
        gates = jnp.concatenate([gates0, gates1], axis=0)          # (2B, 4H)
        act = activations(gates, g_mask)
        h, c = cell(act, c)

    # ---- Linear head on the final layer-1 hidden state (== hlstm[0][1]) ----
    h1 = h[B:2 * B, :]
    logits = jnp.dot(h1, wfc_ref[...],
                     preferred_element_type=f32) + bfc_ref[...]    # (B, 128)

    # LogSoftmax over dim=1.  Padded class lanes carry a -1e30 bias, so they do
    # not perturb the max and underflow to zero in the sum.
    m = jnp.max(logits, axis=1, keepdims=True)
    lse = m + jnp.log(jnp.sum(jnp.exp(logits - m), axis=1, keepdims=True))
    out_ref[...] = logits - lse


@functools.partial(jax.jit, static_argnames=("hidden_size", "num_classes"))
def lstm_try_forward(x, params, *, hidden_size, num_classes):
    """Layout prep (done once under jit) + a single gridless pallas_call."""
    B, T, I = x.shape
    H = hidden_size
    # The whole-vreg activation / lane-mask scheme assumes one 128-lane gate tile.
    assert 4 * H == 128, "kernel assumes 4*hidden_size == 128 (one lane tile)"
    assert num_classes <= 128, "kernel assumes num_classes fits one lane tile"

    Bp = ((B + 7) // 8) * 8        # pad batch to a full sublane tile
    C_PAD = 128                    # lane-dense output width

    # Time-major, batch-padded, flattened: rows [t*Bp:(t+1)*Bp] = timestep t.
    xt = jnp.transpose(x, (1, 0, 2)).astype(jnp.float32)           # (T, B, I)
    xt = jnp.pad(xt, ((0, 0), (0, Bp - B), (0, 0)))                # (T, Bp, I)
    x2 = xt.reshape(T * Bp, I)

    # Weights pre-transposed so the kernel does row-major (K, N) matmuls,
    # lane-dense on N; the two LSTM bias vectors are folded together once.
    wih0_t = params["w_ih_l0"].T                                   # (I, 4H)
    b0 = (params["b_ih_l0"] + params["b_hh_l0"]).reshape(1, -1)    # (1, 4H)
    b1 = (params["b_ih_l1"] + params["b_hh_l1"]).reshape(1, -1)    # (1, 4H)
    # Lane-concatenated recurrent / layer-1-input weights for the wavefront matmul.
    wbig = jnp.concatenate(
        [params["w_hh_l0"].T, params["w_ih_l1"].T, params["w_hh_l1"].T],
        axis=1)                                                    # (H, 12H)

    # FC head padded to a full 128-lane tile; padded class lanes get a huge
    # negative bias so they vanish under log-softmax.
    wfc_pad = jnp.zeros((H, C_PAD), jnp.float32).at[:, :num_classes].set(
        params["w_fc"].T)
    bfc_pad = jnp.full((1, C_PAD), -1e30, jnp.float32).at[0, :num_classes].set(
        params["b_fc"])

    kernel = functools.partial(_lstm_kernel, hidden_size=H, seq_len=T, batch=Bp)
    vmem = pl.BlockSpec(memory_space=pltpu.MemorySpace.VMEM)

    out_pad = pl.pallas_call(
        kernel,
        out_shape=jax.ShapeDtypeStruct((Bp, C_PAD), jnp.float32),
        in_specs=[vmem] * 7,
        out_specs=vmem,
    )(x2, wih0_t, b0, wbig, b1, wfc_pad, bfc_pad)

    # TODO(synk): at larger batch on v7x, add a "parallel" grid axis over batch
    # halves to engage the second TensorCore; pointless at Bp == 8.
    return out_pad[:B, :num_classes]


def _reference_forward(x, params, *, hidden_size):
    """Pure-JAX reference of the PyTorch module's forward."""
    H = hidden_size
    B, T, _ = x.shape

    def cell(x_t, h, c, wih, whh, bih, bhh):
        gates = x_t @ wih.T + bih + h @ whh.T + bhh
        i = jax.nn.sigmoid(gates[:, 0:H])
        f = jax.nn.sigmoid(gates[:, H:2 * H])
        g = jnp.tanh(gates[:, 2 * H:3 * H])
        o = jax.nn.sigmoid(gates[:, 3 * H:4 * H])
        c_new = f * c + i * g
        return o * jnp.tanh(c_new), c_new

    h0 = jnp.zeros((B, H)); c0 = jnp.zeros((B, H))
    h1 = jnp.zeros((B, H)); c1 = jnp.zeros((B, H))
    for t in range(T):
        h0, c0 = cell(x[:, t, :], h0, c0, params["w_ih_l0"], params["w_hh_l0"],
                      params["b_ih_l0"], params["b_hh_l0"])
        h1, c1 = cell(h0, h1, c1, params["w_ih_l1"], params["w_hh_l1"],
                      params["b_ih_l1"], params["b_hh_l1"])
    logits = h1 @ params["w_fc"].T + params["b_fc"]
    return jax.nn.log_softmax(logits, axis=1)


def init_params(key, input_size, hidden_size, num_classes):
    """Deterministic init mirroring PyTorch's U(-1/sqrt(H), 1/sqrt(H))."""
    k = 1.0 / np.sqrt(hidden_size)
    shapes = {
        "w_ih_l0": (4 * hidden_size, input_size),
        "w_hh_l0": (4 * hidden_size, hidden_size),
        "b_ih_l0": (4 * hidden_size,),
        "b_hh_l0": (4 * hidden_size,),
        "w_ih_l1": (4 * hidden_size, hidden_size),
        "w_hh_l1": (4 * hidden_size, hidden_size),
        "b_ih_l1": (4 * hidden_size,),
        "b_hh_l1": (4 * hidden_size,),
        "w_fc": (num_classes, hidden_size),
        "b_fc": (num_classes,),
    }
    params = {}
    for name, shape in shapes.items():
        key, sub = jax.random.split(key)
        params[name] = jax.random.uniform(sub, shape, jnp.float32, minval=-k, maxval=k)
    return params


if __name__ == "__main__":
    batch, seq, input_size, hidden_size, num_classes = 2, 8, 16, 32, 10

    key = jax.random.PRNGKey(0)
    key, xk = jax.random.split(key)
    x = jax.random.normal(xk, (batch, seq, input_size), jnp.float32)
    params = init_params(key, input_size, hidden_size, num_classes)

    out = lstm_try_forward(x, params, hidden_size=hidden_size, num_classes=num_classes)
    out = jax.block_until_ready(out)

    ref = _reference_forward(x, params, hidden_size=hidden_size)
    np.testing.assert_allclose(np.asarray(out), np.asarray(ref), rtol=1e-4, atol=1e-4)

    print("KERNEL_OK")
</pallas_src>

<mosaic_0001>
module attributes {stable_mosaic.version = 11 : i64} {
  func.func @_lstm_kernel(%arg0: memref<64x16xf32, #tpu.memory_space<vmem>>, %arg1: memref<16x128xf32, #tpu.memory_space<vmem>>, %arg2: memref<1x128xf32, #tpu.memory_space<vmem>>, %arg3: memref<32x384xf32, #tpu.memory_space<vmem>>, %arg4: memref<1x128xf32, #tpu.memory_space<vmem>>, %arg5: memref<32x128xf32, #tpu.memory_space<vmem>>, %arg6: memref<1x128xf32, #tpu.memory_space<vmem>>, %arg7: memref<8x128xf32, #tpu.memory_space<vmem>>) attributes {dimension_semantics = [], scalar_prefetch = 0 : i64, scratch_operands = 0 : i64, tpu.core_type = #tpu.core_type<tc>} {
    %0 = tpu.iota {dimensions = array<i32: 1>} : vector<16x128xi32>
    %c64_i32 = arith.constant 64 : i32
    %1 = vector.broadcast %c64_i32 : i32 to vector<16x128xi32>
    %2 = arith.cmpi sge, %0, %1 : vector<16x128xi32>
    %c96_i32 = arith.constant 96 : i32
    %3 = vector.broadcast %c96_i32 : i32 to vector<16x128xi32>
    %4 = arith.cmpi slt, %0, %3 : vector<16x128xi32>
    %5 = arith.andi %2, %4 : vector<16x128xi1>
    %c0 = arith.constant 0 : index
    %c0_0 = arith.constant 0 : index
    %6 = vector.load %arg0[%c0, %c0_0] : memref<64x16xf32, #tpu.memory_space<vmem>>, vector<64x16xf32>
    %c0_1 = arith.constant 0 : index
    %c0_2 = arith.constant 0 : index
    %7 = vector.load %arg1[%c0_1, %c0_2] : memref<16x128xf32, #tpu.memory_space<vmem>>, vector<16x128xf32>
    %cst = arith.constant dense<0.000000e+00> : vector<64x128xf32>
    %8 = tpu.matmul %6, %7, %cst {dimension_numbers = #tpu.dot_dimension_numbers<[1], [0], [0], [1], [0, 0, 1, 1], [], []>} : vector<64x16xf32>, vector<16x128xf32>, vector<64x128xf32> -> vector<64x128xf32>
    %c0_3 = arith.constant 0 : index
    %c0_4 = arith.constant 0 : index
    %9 = vector.load %arg2[%c0_3, %c0_4] : memref<1x128xf32, #tpu.memory_space<vmem>>, vector<1x128xf32>
    %10 = vector.broadcast %9 : vector<1x128xf32> to vector<64x128xf32>
    %11 = arith.addf %8, %10 : vector<64x128xf32>
    %c0_5 = arith.constant 0 : index
    %c0_6 = arith.constant 0 : index
    %12 = vector.load %arg4[%c0_5, %c0_6] : memref<1x128xf32, #tpu.memory_space<vmem>>, vector<1x128xf32>
    %c0_7 = arith.constant 0 : index
    %c0_8 = arith.constant 0 : index
    %13 = vector.load %arg3[%c0_7, %c0_8] : memref<32x384xf32, #tpu.memory_space<vmem>>, vector<32x384xf32>
    %14 = vector.extract_strided_slice %11 {offsets = [0, 0], sizes = [8, 128], strides = [1, 1]} : vector<64x128xf32> to vector<8x128xf32>
    %15 = vector.extract_strided_slice %5 {offsets = [0, 0], sizes = [8, 128], strides = [1, 1]} : vector<16x128xi1> to vector<8x128xi1>
    %cst_9 = arith.constant 5.000000e-01 : f32
    %16 = vector.broadcast %cst_9 : f32 to vector<8x128xf32>
    %17 = arith.mulf %16, %14 : vector<8x128xf32>
    %18 = arith.select %15, %14, %17 : vector<8x128xi1>, vector<8x128xf32>
    %19 = math.tanh %18 : vector<8x128xf32>
    %cst_10 = arith.constant 5.000000e-01 : f32
    %20 = vector.broadcast %cst_10 : f32 to vector<8x128xf32>
    %21 = arith.mulf %20, %19 : vector<8x128xf32>
    %cst_11 = arith.constant 5.000000e-01 : f32
    %22 = vector.broadcast %cst_11 : f32 to vector<8x128xf32>
    %23 = arith.addf %21, %22 : vector<8x128xf32>
    %24 = arith.select %15, %19, %23 : vector<8x128xi1>, vector<8x128xf32>
    %cst_12 = arith.constant 0.000000e+00 : f32
    %25 = vector.broadcast %cst_12 : f32 to vector<8x32xf32>
    %26 = vector.extract_strided_slice %24 {offsets = [0, 0], sizes = [8, 32], strides = [1, 1]} : vector<8x128xf32> to vector<8x32xf32>
    %27 = vector.extract_strided_slice %24 {offsets = [0, 32], sizes = [8, 32], strides = [1, 1]} : vector<8x128xf32> to vector<8x32xf32>
    %28 = vector.extract_strided_slice %24 {offsets = [0, 64], sizes = [8, 32], strides = [1, 1]} : vector<8x128xf32> to vector<8x32xf32>
    %29 = vector.extract_strided_slice %24 {offsets = [0, 96], sizes = [8, 32], strides = [1, 1]} : vector<8x128xf32> to vector<8x32xf32>
    %30 = arith.mulf %27, %25 : vector<8x32xf32>
    %31 = arith.mulf %26, %28 : vector<8x32xf32>
    %32 = arith.addf %30, %31 : vector<8x32xf32>
    %33 = math.tanh %32 : vector<8x32xf32>
    %34 = arith.mulf %29, %33 : vector<8x32xf32>
    %cst_13 = arith.constant 0.000000e+00 : f32
    %35 = vector.broadcast %cst_13 : f32 to vector<8x32xf32>
    %36 = tpu.concatenate %34, %35 in 0 : vector<8x32xf32>, vector<8x32xf32> -> vector<16x32xf32>
    %cst_14 = arith.constant 0.000000e+00 : f32
    %37 = vector.broadcast %cst_14 : f32 to vector<8x32xf32>
    %38 = tpu.concatenate %32, %37 in 0 : vector<8x32xf32>, vector<8x32xf32> -> vector<16x32xf32>
    %cst_15 = arith.constant dense<0.000000e+00> : vector<16x384xf32>
    %39 = tpu.matmul %36, %13, %cst_15 {dimension_numbers = #tpu.dot_dimension_numbers<[1], [0], [0], [1], [0, 0, 1, 1], [], []>} : vector<16x32xf32>, vector<32x384xf32>, vector<16x384xf32> -> vector<16x384xf32>
    %40 = vector.extract_strided_slice %11 {offsets = [8, 0], sizes = [8, 128], strides = [1, 1]} : vector<64x128xf32> to vector<8x128xf32>
    %41 = vector.extract_strided_slice %39 {offsets = [0, 0], sizes = [8, 128], strides = [1, 1]} : vector<16x384xf32> to vector<8x128xf32>
    %42 = arith.addf %40, %41 : vector<8x128xf32>
    %43 = vector.extract_strided_slice %39 {offsets = [0, 128], sizes = [8, 128], strides = [1, 1]} : vector<16x384xf32> to vector<8x128xf32>
    %44 = vector.broadcast %12 : vector<1x128xf32> to vector<8x128xf32>
    %45 = arith.addf %43, %44 : vector<8x128xf32>
    %46 = vector.extract_strided_slice %39 {offsets = [8, 256], sizes = [8, 128], strides = [1, 1]} : vector<16x384xf32> to vector<8x128xf32>
    %47 = arith.addf %45, %46 : vector<8x128xf32>
    %48 = tpu.concatenate %42, %47 in 0 : vector<8x128xf32>, vector<8x128xf32> -> vector<16x128xf32>
    %cst_16 = arith.constant 5.000000e-01 : f32
    %49 = vector.broadcast %cst_16 : f32 to vector<16x128xf32>
    %50 = arith.mulf %49, %48 : vector<16x128xf32>
    %51 = arith.select %5, %48, %50 : vector<16x128xi1>, vector<16x128xf32>
    %52 = math.tanh %51 : vector<16x128xf32>
    %cst_17 = arith.constant 5.000000e-01 : f32
    %53 = vector.broadcast %cst_17 : f32 to vector<16x128xf32>
    %54 = arith.mulf %53, %52 : vector<16x128xf32>
    %cst_18 = arith.constant 5.000000e-01 : f32
    %55 = vector.broadcast %cst_18 : f32 to vector<16x128xf32>
    %56 = arith.addf %54, %55 : vector<16x128xf32>
    %57 = arith.select %5, %52, %56 : vector<16x128xi1>, vector<16x128xf32>
    %58 = vector.extract_strided_slice %57 {offsets = [0, 0], sizes = [16, 32], strides = [1, 1]} : vector<16x128xf32> to vector<16x32xf32>
    %59 = vector.extract_strided_slice %57 {offsets = [0, 32], sizes = [16, 32], strides = [1, 1]} : vector<16x128xf32> to vector<16x32xf32>
    %60 = vector.extract_strided_slice %57 {offsets = [0, 64], sizes = [16, 32], strides = [1, 1]} : vector<16x128xf32> to vector<16x32xf32>
    %61 = vector.extract_strided_slice %57 {offsets = [0, 96], sizes = [16, 32], strides = [1, 1]} : vector<16x128xf32> to vector<16x32xf32>
    %62 = arith.mulf %59, %38 : vector<16x32xf32>
    %63 = arith.mulf %58, %60 : vector<16x32xf32>
    %64 = arith.addf %62, %63 : vector<16x32xf32>
    %65 = math.tanh %64 : vector<16x32xf32>
    %66 = arith.mulf %61, %65 : vector<16x32xf32>
    %cst_19 = arith.constant dense<0.000000e+00> : vector<16x384xf32>
    %67 = tpu.matmul %66, %13, %cst_19 {dimension_numbers = #tpu.dot_dimension_numbers<[1], [0], [0], [1], [0, 0, 1, 1], [], []>} : vector<16x32xf32>, vector<32x384xf32>, vector<16x384xf32> -> vector<16x384xf32>
    %68 = vector.extract_strided_slice %11 {offsets = [16, 0], sizes = [8, 128], strides = [1, 1]} : vector<64x128xf32> to vector<8x128xf32>
    %69 = vector.extract_strided_slice %67 {offsets = [0, 0], sizes = [8, 128], strides = [1, 1]} : vector<16x384xf32> to vector<8x128xf32>
    %70 = arith.addf %68, %69 : vector<8x128xf32>
    %71 = vector.extract_strided_slice %67 {offsets = [0, 128], sizes = [8, 128], strides = [1, 1]} : vector<16x384xf32> to vector<8x128xf32>
    %72 = vector.broadcast %12 : vector<1x128xf32> to vector<8x128xf32>
    %73 = arith.addf %71, %72 : vector<8x128xf32>
    %74 = vector.extract_strided_slice %67 {offsets = [8, 256], sizes = [8, 128], strides = [1, 1]} : vector<16x384xf32> to vector<8x128xf32>
    %75 = arith.addf %73, %74 : vector<8x128xf32>
    %76 = tpu.concatenate %70, %75 in 0 : vector<8x128xf32>, vector<8x128xf32> -> vector<16x128xf32>
    %cst_20 = arith.constant 5.000000e-01 : f32
    %77 = vector.broadcast %cst_20 : f32 to vector<16x128xf32>
    %78 = arith.mulf %77, %76 : vector<16x128xf32>
    %79 = arith.select %5, %76, %78 : vector<16x128xi1>, vector<16x128xf32>
    %80 = math.tanh %79 : vector<16x128xf32>
    %cst_21 = arith.constant 5.000000e-01 : f32
    %81 = vector.broadcast %cst_21 : f32 to vector<16x128xf32>
    %82 = arith.mulf %81, %80 : vector<16x128xf32>
    %cst_22 = arith.constant 5.000000e-01 : f32
    %83 = vector.broadcast %cst_22 : f32 to vector<16x128xf32>
    %84 = arith.addf %82, %83 : vector<16x128xf32>
    %85 = arith.select %5, %80, %84 : vector<16x128xi1>, vector<16x128xf32>
    %86 = vector.extract_strided_slice %85 {offsets = [0, 0], sizes = [16, 32], strides = [1, 1]} : vector<16x128xf32> to vector<16x32xf32>
    %87 = vector.extract_strided_slice %85 {offsets = [0, 32], sizes = [16, 32], strides = [1, 1]} : vector<16x128xf32> to vector<16x32xf32>
    %88 = vector.extract_strided_slice %85 {offsets = [0, 64], sizes = [16, 32], strides = [1, 1]} : vector<16x128xf32> to vector<16x32xf32>
    %89 = vector.extract_strided_slice %85 {offsets = [0, 96], sizes = [16, 32], strides = [1, 1]} : vector<16x128xf32> to vector<16x32xf32>
    %90 = arith.mulf %87, %64 : vector<16x32xf32>
    %91 = arith.mulf %86, %88 : vector<16x32xf32>
    %92 = arith.addf %90, %91 : vector<16x32xf32>
    %93 = math.tanh %92 : vector<16x32xf32>
    %94 = arith.mulf %89, %93 : vector<16x32xf32>
    %cst_23 = arith.constant dense<0.000000e+00> : vector<16x384xf32>
    %95 = tpu.matmul %94, %13, %cst_23 {dimension_numbers = #tpu.dot_dimension_numbers<[1], [0], [0], [1], [0, 0, 1, 1], [], []>} : vector<16x32xf32>, vector<32x384xf32>, vector<16x384xf32> -> vector<16x384xf32>
    %96 = vector.extract_strided_slice %11 {offsets = [24, 0], sizes = [8, 128], strides = [1, 1]} : vector<64x128xf32> to vector<8x128xf32>
    %97 = vector.extract_strided_slice %95 {offsets = [0, 0], sizes = [8, 128], strides = [1, 1]} : vector<16x384xf32> to vector<8x128xf32>
    %98 = arith.addf %96, %97 : vector<8x128xf32>
    %99 = vector.extract_strided_slice %95 {offsets = [0, 128], sizes = [8, 128], strides = [1, 1]} : vector<16x384xf32> to vector<8x128xf32>
    %100 = vector.broadcast %12 : vector<1x128xf32> to vector<8x128xf32>
    %101 = arith.addf %99, %100 : vector<8x128xf32>
    %102 = vector.extract_strided_slice %95 {offsets = [8, 256], sizes = [8, 128], strides = [1, 1]} : vector<16x384xf32> to vector<8x128xf32>
    %103 = arith.addf %101, %102 : vector<8x128xf32>
    %104 = tpu.concatenate %98, %103 in 0 : vector<8x128xf32>, vector<8x128xf32> -> vector<16x128xf32>
    %cst_24 = arith.constant 5.000000e-01 : f32
    %105 = vector.broadcast %cst_24 : f32 to vector<16x128xf32>
    %106 = arith.mulf %105, %104 : vector<16x128xf32>
    %107 = arith.select %5, %104, %106 : vector<16x128xi1>, vector<16x128xf32>
    %108 = math.tanh %107 : vector<16x128xf32>
    %cst_25 = arith.constant 5.000000e-01 : f32
    %109 = vector.broadcast %cst_25 : f32 to vector<16x128xf32>
    %110 = arith.mulf %109, %108 : vector<16x128xf32>
    %cst_26 = arith.constant 5.000000e-01 : f32
    %111 = vector.broadcast %cst_26 : f32 to vector<16x128xf32>
    %112 = arith.addf %110, %111 : vector<16x128xf32>
    %113 = arith.select %5, %108, %112 : vector<16x128xi1>, vector<16x128xf32>
    %114 = vector.extract_strided_slice %113 {offsets = [0, 0], sizes = [16, 32], strides = [1, 1]} : vector<16x128xf32> to vector<16x32xf32>
    %115 = vector.extract_strided_slice %113 {offsets = [0, 32], sizes = [16, 32], strides = [1, 1]} : vector<16x128xf32> to vector<16x32xf32>
    %116 = vector.extract_strided_slice %113 {offsets = [0, 64], sizes = [16, 32], strides = [1, 1]} : vector<16x128xf32> to vector<16x32xf32>
    %117 = vector.extract_strided_slice %113 {offsets = [0, 96], sizes = [16, 32], strides = [1, 1]} : vector<16x128xf32> to vector<16x32xf32>
    %118 = arith.mulf %115, %92 : vector<16x32xf32>
    %119 = arith.mulf %114, %116 : vector<16x32xf32>
    %120 = arith.addf %118, %119 : vector<16x32xf32>
    %121 = math.tanh %120 : vector<16x32xf32>
    %122 = arith.mulf %117, %121 : vector<16x32xf32>
    %cst_27 = arith.constant dense<0.000000e+00> : vector<16x384xf32>
    %123 = tpu.matmul %122, %13, %cst_27 {dimension_numbers = #tpu.dot_dimension_numbers<[1], [0], [0], [1], [0, 0, 1, 1], [], []>} : vector<16x32xf32>, vector<32x384xf32>, vector<16x384xf32> -> vector<16x384xf32>
    %124 = vector.extract_strided_slice %11 {offsets = [32, 0], sizes = [8, 128], strides = [1, 1]} : vector<64x128xf32> to vector<8x128xf32>
    %125 = vector.extract_strided_slice %123 {offsets = [0, 0], sizes = [8, 128], strides = [1, 1]} : vector<16x384xf32> to vector<8x128xf32>
    %126 = arith.addf %124, %125 : vector<8x128xf32>
    %127 = vector.extract_strided_slice %123 {offsets = [0, 128], sizes = [8, 128], strides = [1, 1]} : vector<16x384xf32> to vector<8x128xf32>
    %128 = vector.broadcast %12 : vector<1x128xf32> to vector<8x128xf32>
    %129 = arith.addf %127, %128 : vector<8x128xf32>
    %130 = vector.extract_strided_slice %123 {offsets = [8, 256], sizes = [8, 128], strides = [1, 1]} : vector<16x384xf32> to vector<8x128xf32>
    %131 = arith.addf %129, %130 : vector<8x128xf32>
    %132 = tpu.concatenate %126, %131 in 0 : vector<8x128xf32>, vector<8x128xf32> -> vector<16x128xf32>
    %cst_28 = arith.constant 5.000000e-01 : f32
    %133 = vector.broadcast %cst_28 : f32 to vector<16x128xf32>
    %134 = arith.mulf %133, %132 : vector<16x128xf32>
    %135 = arith.select %5, %132, %134 : vector<16x128xi1>, vector<16x128xf32>
    %136 = math.tanh %135 : vector<16x128xf32>
    %cst_29 = arith.constant 5.000000e-01 : f32
    %137 = vector.broadcast %cst_29 : f32 to vector<16x128xf32>
    %138 = arith.mulf %137, %136 : vector<16x128xf32>
    %cst_30 = arith.constant 5.000000e-01 : f32
    %139 = vector.broadcast %cst_30 : f32 to vector<16x128xf32>
    %140 = arith.addf %138, %139 : vector<16x128xf32>
    %141 = arith.select %5, %136, %140 : vector<16x128xi1>, vector<16x128xf32>
    %142 = vector.extract_strided_slice %141 {offsets = [0, 0], sizes = [16, 32], strides = [1, 1]} : vector<16x128xf32> to vector<16x32xf32>
    %143 = vector.extract_strided_slice %141 {offsets = [0, 32], sizes = [16, 32], strides = [1, 1]} : vector<16x128xf32> to vector<16x32xf32>
    %144 = vector.extract_strided_slice %141 {offsets = [0, 64], sizes = [16, 32], strides = [1, 1]} : vector<16x128xf32> to vector<16x32xf32>
    %145 = vector.extract_strided_slice %141 {offsets = [0, 96], sizes = [16, 32], strides = [1, 1]} : vector<16x128xf32> to vector<16x32xf32>
    %146 = arith.mulf %143, %120 : vector<16x32xf32>
    %147 = arith.mulf %142, %144 : vector<16x32xf32>
    %148 = arith.addf %146, %147 : vector<16x32xf32>
    %149 = math.tanh %148 : vector<16x32xf32>
    %150 = arith.mulf %145, %149 : vector<16x32xf32>
    %cst_31 = arith.constant dense<0.000000e+00> : vector<16x384xf32>
    %151 = tpu.matmul %150, %13, %cst_31 {dimension_numbers = #tpu.dot_dimension_numbers<[1], [0], [0], [1], [0, 0, 1, 1], [], []>} : vector<16x32xf32>, vector<32x384xf32>, vector<16x384xf32> -> vector<16x384xf32>
    %152 = vector.extract_strided_slice %11 {offsets = [40, 0], sizes = [8, 128], strides = [1, 1]} : vector<64x128xf32> to vector<8x128xf32>
    %153 = vector.extract_strided_slice %151 {offsets = [0, 0], sizes = [8, 128], strides = [1, 1]} : vector<16x384xf32> to vector<8x128xf32>
    %154 = arith.addf %152, %153 : vector<8x128xf32>
    %155 = vector.extract_strided_slice %151 {offsets = [0, 128], sizes = [8, 128], strides = [1, 1]} : vector<16x384xf32> to vector<8x128xf32>
    %156 = vector.broadcast %12 : vector<1x128xf32> to vector<8x128xf32>
    %157 = arith.addf %155, %156 : vector<8x128xf32>
    %158 = vector.extract_strided_slice %151 {offsets = [8, 256], sizes = [8, 128], strides = [1, 1]} : vector<16x384xf32> to vector<8x128xf32>
    %159 = arith.addf %157, %158 : vector<8x128xf32>
    %160 = tpu.concatenate %154, %159 in 0 : vector<8x128xf32>, vector<8x128xf32> -> vector<16x128xf32>
    %cst_32 = arith.constant 5.000000e-01 : f32
    %161 = vector.broadcast %cst_32 : f32 to vector<16x128xf32>
    %162 = arith.mulf %161, %160 : vector<16x128xf32>
    %163 = arith.select %5, %160, %162 : vector<16x128xi1>, vector<16x128xf32>
    %164 = math.tanh %163 : vector<16x128xf32>
    %cst_33 = arith.constant 5.000000e-01 : f32
    %165 = vector.broadcast %cst_33 : f32 to vector<16x128xf32>
    %166 = arith.mulf %165, %164 : vector<16x128xf32>
    %cst_34 = arith.constant 5.000000e-01 : f32
    %167 = vector.broadcast %cst_34 : f32 to vector<16x128xf32>
    %168 = arith.addf %166, %167 : vector<16x128xf32>
    %169 = arith.select %5, %164, %168 : vector<16x128xi1>, vector<16x128xf32>
    %170 = vector.extract_strided_slice %169 {offsets = [0, 0], sizes = [16, 32], strides = [1, 1]} : vector<16x128xf32> to vector<16x32xf32>
    %171 = vector.extract_strided_slice %169 {offsets = [0, 32], sizes = [16, 32], strides = [1, 1]} : vector<16x128xf32> to vector<16x32xf32>
    %172 = vector.extract_strided_slice %169 {offsets = [0, 64], sizes = [16, 32], strides = [1, 1]} : vector<16x128xf32> to vector<16x32xf32>
    %173 = vector.extract_strided_slice %169 {offsets = [0, 96], sizes = [16, 32], strides = [1, 1]} : vector<16x128xf32> to vector<16x32xf32>
    %174 = arith.mulf %171, %148 : vector<16x32xf32>
    %175 = arith.mulf %170, %172 : vector<16x32xf32>
    %176 = arith.addf %174, %175 : vector<16x32xf32>
    %177 = math.tanh %176 : vector<16x32xf32>
    %178 = arith.mulf %173, %177 : vector<16x32xf32>
    %cst_35 = arith.constant dense<0.000000e+00> : vector<16x384xf32>
    %179 = tpu.matmul %178, %13, %cst_35 {dimension_numbers = #tpu.dot_dimension_numbers<[1], [0], [0], [1], [0, 0, 1, 1], [], []>} : vector<16x32xf32>, vector<32x384xf32>, vector<16x384xf32> -> vector<16x384xf32>
    %180 = vector.extract_strided_slice %11 {offsets = [48, 0], sizes = [8, 128], strides = [1, 1]} : vector<64x128xf32> to vector<8x128xf32>
    %181 = vector.extract_strided_slice %179 {offsets = [0, 0], sizes = [8, 128], strides = [1, 1]} : vector<16x384xf32> to vector<8x128xf32>
    %182 = arith.addf %180, %181 : vector<8x128xf32>
    %183 = vector.extract_strided_slice %179 {offsets = [0, 128], sizes = [8, 128], strides = [1, 1]} : vector<16x384xf32> to vector<8x128xf32>
    %184 = vector.broadcast %12 : vector<1x128xf32> to vector<8x128xf32>
    %185 = arith.addf %183, %184 : vector<8x128xf32>
    %186 = vector.extract_strided_slice %179 {offsets = [8, 256], sizes = [8, 128], strides = [1, 1]} : vector<16x384xf32> to vector<8x128xf32>
    %187 = arith.addf %185, %186 : vector<8x128xf32>
    %188 = tpu.concatenate %182, %187 in 0 : vector<8x128xf32>, vector<8x128xf32> -> vector<16x128xf32>
    %cst_36 = arith.constant 5.000000e-01 : f32
    %189 = vector.broadcast %cst_36 : f32 to vector<16x128xf32>
    %190 = arith.mulf %189, %188 : vector<16x128xf32>
    %191 = arith.select %5, %188, %190 : vector<16x128xi1>, vector<16x128xf32>
    %192 = math.tanh %191 : vector<16x128xf32>
    %cst_37 = arith.constant 5.000000e-01 : f32
    %193 = vector.broadcast %cst_37 : f32 to vector<16x128xf32>
    %194 = arith.mulf %193, %192 : vector<16x128xf32>
    %cst_38 = arith.constant 5.000000e-01 : f32
    %195 = vector.broadcast %cst_38 : f32 to vector<16x128xf32>
    %196 = arith.addf %194, %195 : vector<16x128xf32>
    %197 = arith.select %5, %192, %196 : vector<16x128xi1>, vector<16x128xf32>
    %198 = vector.extract_strided_slice %197 {offsets = [0, 0], sizes = [16, 32], strides = [1, 1]} : vector<16x128xf32> to vector<16x32xf32>
    %199 = vector.extract_strided_slice %197 {offsets = [0, 32], sizes = [16, 32], strides = [1, 1]} : vector<16x128xf32> to vector<16x32xf32>
    %200 = vector.extract_strided_slice %197 {offsets = [0, 64], sizes = [16, 32], strides = [1, 1]} : vector<16x128xf32> to vector<16x32xf32>
    %201 = vector.extract_strided_slice %197 {offsets = [0, 96], sizes = [16, 32], strides = [1, 1]} : vector<16x128xf32> to vector<16x32xf32>
    %202 = arith.mulf %199, %176 : vector<16x32xf32>
    %203 = arith.mulf %198, %200 : vector<16x32xf32>
    %204 = arith.addf %202, %203 : vector<16x32xf32>
    %205 = math.tanh %204 : vector<16x32xf32>
    %206 = arith.mulf %201, %205 : vector<16x32xf32>
    %cst_39 = arith.constant dense<0.000000e+00> : vector<16x384xf32>
    %207 = tpu.matmul %206, %13, %cst_39 {dimension_numbers = #tpu.dot_dimension_numbers<[1], [0], [0], [1], [0, 0, 1, 1], [], []>} : vector<16x32xf32>, vector<32x384xf32>, vector<16x384xf32> -> vector<16x384xf32>
    %208 = vector.extract_strided_slice %11 {offsets = [56, 0], sizes = [8, 128], strides = [1, 1]} : vector<64x128xf32> to vector<8x128xf32>
    %209 = vector.extract_strided_slice %207 {offsets = [0, 0], sizes = [8, 128], strides = [1, 1]} : vector<16x384xf32> to vector<8x128xf32>
    %210 = arith.addf %208, %209 : vector<8x128xf32>
    %211 = vector.extract_strided_slice %207 {offsets = [0, 128], sizes = [8, 128], strides = [1, 1]} : vector<16x384xf32> to vector<8x128xf32>
    %212 = vector.broadcast %12 : vector<1x128xf32> to vector<8x128xf32>
    %213 = arith.addf %211, %212 : vector<8x128xf32>
    %214 = vector.extract_strided_slice %207 {offsets = [8, 256], sizes = [8, 128], strides = [1, 1]} : vector<16x384xf32> to vector<8x128xf32>
    %215 = arith.addf %213, %214 : vector<8x128xf32>
    %216 = tpu.concatenate %210, %215 in 0 : vector<8x128xf32>, vector<8x128xf32> -> vector<16x128xf32>
    %cst_40 = arith.constant 5.000000e-01 : f32
    %217 = vector.broadcast %cst_40 : f32 to vector<16x128xf32>
    %218 = arith.mulf %217, %216 : vector<16x128xf32>
    %219 = arith.select %5, %216, %218 : vector<16x128xi1>, vector<16x128xf32>
    %220 = math.tanh %219 : vector<16x128xf32>
    %cst_41 = arith.constant 5.000000e-01 : f32
    %221 = vector.broadcast %cst_41 : f32 to vector<16x128xf32>
    %222 = arith.mulf %221, %220 : vector<16x128xf32>
    %cst_42 = arith.constant 5.000000e-01 : f32
    %223 = vector.broadcast %cst_42 : f32 to vector<16x128xf32>
    %224 = arith.addf %222, %223 : vector<16x128xf32>
    %225 = arith.select %5, %220, %224 : vector<16x128xi1>, vector<16x128xf32>
    %226 = vector.extract_strided_slice %225 {offsets = [0, 0], sizes = [16, 32], strides = [1, 1]} : vector<16x128xf32> to vector<16x32xf32>
    %227 = vector.extract_strided_slice %225 {offsets = [0, 32], sizes = [16, 32], strides = [1, 1]} : vector<16x128xf32> to vector<16x32xf32>
    %228 = vector.extract_strided_slice %225 {offsets = [0, 64], sizes = [16, 32], strides = [1, 1]} : vector<16x128xf32> to vector<16x32xf32>
    %229 = vector.extract_strided_slice %225 {offsets = [0, 96], sizes = [16, 32], strides = [1, 1]} : vector<16x128xf32> to vector<16x32xf32>
    %230 = arith.mulf %227, %204 : vector<16x32xf32>
    %231 = arith.mulf %226, %228 : vector<16x32xf32>
    %232 = arith.addf %230, %231 : vector<16x32xf32>
    %233 = math.tanh %232 : vector<16x32xf32>
    %234 = arith.mulf %229, %233 : vector<16x32xf32>
    %cst_43 = arith.constant dense<0.000000e+00> : vector<16x384xf32>
    %235 = tpu.matmul %234, %13, %cst_43 {dimension_numbers = #tpu.dot_dimension_numbers<[1], [0], [0], [1], [0, 0, 1, 1], [], []>} : vector<16x32xf32>, vector<32x384xf32>, vector<16x384xf32> -> vector<16x384xf32>
    %236 = vector.extract_strided_slice %11 {offsets = [56, 0], sizes = [8, 128], strides = [1, 1]} : vector<64x128xf32> to vector<8x128xf32>
    %237 = vector.extract_strided_slice %235 {offsets = [0, 0], sizes = [8, 128], strides = [1, 1]} : vector<16x384xf32> to vector<8x128xf32>
    %238 = arith.addf %236, %237 : vector<8x128xf32>
    %239 = vector.extract_strided_slice %235 {offsets = [0, 128], sizes = [8, 128], strides = [1, 1]} : vector<16x384xf32> to vector<8x128xf32>
    %240 = vector.broadcast %12 : vector<1x128xf32> to vector<8x128xf32>
    %241 = arith.addf %239, %240 : vector<8x128xf32>
    %242 = vector.extract_strided_slice %235 {offsets = [8, 256], sizes = [8, 128], strides = [1, 1]} : vector<16x384xf32> to vector<8x128xf32>
    %243 = arith.addf %241, %242 : vector<8x128xf32>
    %244 = tpu.concatenate %238, %243 in 0 : vector<8x128xf32>, vector<8x128xf32> -> vector<16x128xf32>
    %cst_44 = arith.constant 5.000000e-01 : f32
    %245 = vector.broadcast %cst_44 : f32 to vector<16x128xf32>
    %246 = arith.mulf %245, %244 : vector<16x128xf32>
    %247 = arith.select %5, %244, %246 : vector<16x128xi1>, vector<16x128xf32>
    %248 = math.tanh %247 : vector<16x128xf32>
    %cst_45 = arith.constant 5.000000e-01 : f32
    %249 = vector.broadcast %cst_45 : f32 to vector<16x128xf32>
    %250 = arith.mulf %249, %248 : vector<16x128xf32>
    %cst_46 = arith.constant 5.000000e-01 : f32
    %251 = vector.broadcast %cst_46 : f32 to vector<16x128xf32>
    %252 = arith.addf %250, %251 : vector<16x128xf32>
    %253 = arith.select %5, %248, %252 : vector<16x128xi1>, vector<16x128xf32>
    %254 = vector.extract_strided_slice %253 {offsets = [0, 0], sizes = [16, 32], strides = [1, 1]} : vector<16x128xf32> to vector<16x32xf32>
    %255 = vector.extract_strided_slice %253 {offsets = [0, 32], sizes = [16, 32], strides = [1, 1]} : vector<16x128xf32> to vector<16x32xf32>
    %256 = vector.extract_strided_slice %253 {offsets = [0, 64], sizes = [16, 32], strides = [1, 1]} : vector<16x128xf32> to vector<16x32xf32>
    %257 = vector.extract_strided_slice %253 {offsets = [0, 96], sizes = [16, 32], strides = [1, 1]} : vector<16x128xf32> to vector<16x32xf32>
    %258 = arith.mulf %255, %232 : vector<16x32xf32>
    %259 = arith.mulf %254, %256 : vector<16x32xf32>
    %260 = arith.addf %258, %259 : vector<16x32xf32>
    %261 = math.tanh %260 : vector<16x32xf32>
    %262 = arith.mulf %257, %261 : vector<16x32xf32>
    %263 = vector.extract_strided_slice %262 {offsets = [8, 0], sizes = [8, 32], strides = [1, 1]} : vector<16x32xf32> to vector<8x32xf32>
    %c0_47 = arith.constant 0 : index
    %c0_48 = arith.constant 0 : index
    %264 = vector.load %arg5[%c0_47, %c0_48] : memref<32x128xf32, #tpu.memory_space<vmem>>, vector<32x128xf32>
    %cst_49 = arith.constant dense<0.000000e+00> : vector<8x128xf32>
    %265 = tpu.matmul %263, %264, %cst_49 {dimension_numbers = #tpu.dot_dimension_numbers<[1], [0], [0], [1], [0, 0, 1, 1], [], []>} : vector<8x32xf32>, vector<32x128xf32>, vector<8x128xf32> -> vector<8x128xf32>
    %c0_50 = arith.constant 0 : index
    %c0_51 = arith.constant 0 : index
    %266 = vector.load %arg6[%c0_50, %c0_51] : memref<1x128xf32, #tpu.memory_space<vmem>>, vector<1x128xf32>
    %267 = vector.broadcast %266 : vector<1x128xf32> to vector<8x128xf32>
    %268 = arith.addf %265, %267 : vector<8x128xf32>
    %cst_52 = arith.constant dense<0xFF800000> : vector<8xf32>
    %269 = vector.multi_reduction <maximumf>, %268, %cst_52 [1] : vector<8x128xf32> to vector<8xf32>
    %270 = vector.shape_cast %269 : vector<8xf32> to vector<8x1xf32>
    %271 = vector.broadcast %270 : vector<8x1xf32> to vector<8x128xf32>
    %272 = arith.subf %268, %271 : vector<8x128xf32>
    %273 = math.exp %272 : vector<8x128xf32>
    %cst_53 = arith.constant dense<0.000000e+00> : vector<8xf32>
    %274 = vector.multi_reduction <add>, %273, %cst_53 [1] : vector<8x128xf32> to vector<8xf32>
    %275 = vector.shape_cast %274 : vector<8xf32> to vector<8x1xf32>
    %276 = math.log %275 : vector<8x1xf32>
    %277 = arith.addf %270, %276 : vector<8x1xf32>
    %278 = vector.broadcast %277 : vector<8x1xf32> to vector<8x128xf32>
    %279 = arith.subf %268, %278 : vector<8x128xf32>
    %c0_54 = arith.constant 0 : index
    %c0_55 = arith.constant 0 : index
    %280 = vector.load %arg7[%c0_54, %c0_55] : memref<8x128xf32, #tpu.memory_space<vmem>>, vector<8x128xf32>
    tpu.vector_store %arg7[%c0_54, %c0_55], %279 {strides = array<i32>} : memref<8x128xf32, #tpu.memory_space<vmem>>, vector<8x128xf32>,
    return
  }
}

</mosaic_0001>

<llo_original>
// kernel: lstm_try_forward.1
$region0: #{lstm_try_forward.1}
  #allocation0 [shape = 'u32[]', space=smem, size = 0x4, offset = 0x4, fixed_abs, tag = 'smem constant byte address 0x4 - core index']
  #allocation1 [shape = 'u32[144,128]{1,0:T(1,128)}', space=vmem, size = 0x12000, scoped, tag = 'internal scratch']
  %s0 = inlined_call_operand.vmem [shape: f32[64,16], index: 0, kind: input, shape index: {}]
  %s1 = inlined_call_operand.vmem [shape: f32[16,128], index: 1, kind: input, shape index: {}]
  %s2 = inlined_call_operand.vmem [shape: f32[1,128], index: 2, kind: input, shape index: {}]
  %s3 = inlined_call_operand.vmem [shape: f32[32,384], index: 3, kind: input, shape index: {}]
  %s4 = inlined_call_operand.vmem [shape: f32[1,128], index: 4, kind: input, shape index: {}]
  %s5 = inlined_call_operand.vmem [shape: f32[32,128], index: 5, kind: input, shape index: {}]
  %s6 = inlined_call_operand.vmem [shape: f32[1,128], index: 6, kind: input, shape index: {}]
  %s7 = inlined_call_operand.vmem [shape: f32[8,128], index: 7, kind: output, shape index: {}]
  %s8 = sld [smem:[#allocation0]]
  $region38: #{lstm_try_forward.1} parent=0
    _
  %s10 = ssub.s32 1, %s8
  %s11 = scalar_select 0, %s10, %s8
  // Predicated region
  $region2: #{lstm_try_forward.1} parent=0 // pred_check
    _
  $region3: #{lstm_try_forward.1} parent=0 // pred_check_branch
    %13 = sbr.rel (0) target = $region5
  $region4: #{lstm_try_forward.1} parent=0 // pred_region
    _
  $region5: #{lstm_try_forward.1} parent=0 // pred_fallthru
    _
  // Predicated region
  $region6: #{lstm_try_forward.1} parent=0 // pred_check
    _
  $region7: #{lstm_try_forward.1} parent=0 // pred_check_branch
    %15 = sbr.rel (0) target = $region9
  $region8: #{lstm_try_forward.1} parent=0 // pred_region
    _
  $region9: #{lstm_try_forward.1} parent=0 // pred_fallthru
    _
  // Predicated region
  $region10: #{lstm_try_forward.1} parent=0 // pred_check
    _
  $region11: #{lstm_try_forward.1} parent=0 // pred_check_branch
    %17 = sbr.rel (0) target = $region13
  $region12: #{lstm_try_forward.1} parent=0 // pred_region
    _
  $region13: #{lstm_try_forward.1} parent=0 // pred_fallthru
    _
  // Predicated region
  $region14: #{lstm_try_forward.1} parent=0 // pred_check
    _
  $region15: #{lstm_try_forward.1} parent=0 // pred_check_branch
    %19 = sbr.rel (0) target = $region17
  $region16: #{lstm_try_forward.1} parent=0 // pred_region
    _
  $region17: #{lstm_try_forward.1} parent=0 // pred_fallthru
    _
  // Predicated region
  $region18: #{lstm_try_forward.1} parent=0 // pred_check
    _
  $region19: #{lstm_try_forward.1} parent=0 // pred_check_branch
    %21 = sbr.rel (0) target = $region21
  $region20: #{lstm_try_forward.1} parent=0 // pred_region
    _
  $region21: #{lstm_try_forward.1} parent=0 // pred_fallthru
    _
  // Predicated region
  $region22: #{lstm_try_forward.1} parent=0 // pred_check
    _
  $region23: #{lstm_try_forward.1} parent=0 // pred_check_branch
    %23 = sbr.rel (0) target = $region25
  $region24: #{lstm_try_forward.1} parent=0 // pred_region
    _
  $region25: #{lstm_try_forward.1} parent=0 // pred_fallthru
    _
  // Predicated region
  $region26: #{lstm_try_forward.1} parent=0 // pred_check
    _
  $region27: #{lstm_try_forward.1} parent=0 // pred_check_branch
    %25 = sbr.rel (0) target = $region29
  $region28: #{lstm_try_forward.1} parent=0 // pred_region
    _
  $region29: #{lstm_try_forward.1} parent=0 // pred_fallthru
    _
  %v26 = vlaneseq
  %v27 = vand.u32 %v26, 127
  %vm28 = vcmp.ge.s32.totalorder %v27, 64
  %vm29 = vcmp.lt.s32.totalorder %v27, 96
  %vm30 = vmand %vm28, %vm29
  %v31 = vld [vmem:[%s0] sm:$0xff]
  %v32 = vld [vmem:[%s0 + $0x8] sm:$0xff]
  %v33 = vld [vmem:[%s0 + $0x10] sm:$0xff]
  %v34 = vld [vmem:[%s0 + $0x18] sm:$0xff]
  %v35 = vld [vmem:[%s0 + $0x20] sm:$0xff]
  %v36 = vld [vmem:[%s0 + $0x28] sm:$0xff]
  %v37 = vld [vmem:[%s0 + $0x30] sm:$0xff]
  %v38 = vld [vmem:[%s0 + $0x38] sm:$0xff]
  %v39 = vld [vmem:[%s1] sm:$0xff]
  %v40 = vld [vmem:[%s1 + $0x8] sm:$0xff]
  %v41 = vld [vmem:[%s2] sm:$0x1]
  %v43 = vlaneseq
  %v44 = vshrl.u32 %v43, 7
  %v45 = vsub.s32 0, %v44
  %v46 = vrot.slane %v41, %v45
  %vm48 = vcmask 130048
  %v50 = vsel %vm48, %v31, 0
  %v53 = vsel %vm48, %v32, 0
  %v56 = vsel %vm48, %v33, 0
  %v59 = vsel %vm48, %v34, 0
  %v62 = vsel %vm48, %v35, 0
  %v65 = vsel %vm48, %v36, 0
  %v68 = vsel %vm48, %v37, 0
  %v71 = vsel %vm48, %v38, 0
  %73 = vmatprep.subr.mxu0 0.0
  %74 = vmatpush1.msra.mxu0 %v39
  %75 = vmatprep.subr.mxu0 0.0
  %76 = vmatpush1.msra.mxu0 %v40
  %77 = vmatprep.subr.mxu0 0.0
  %78 = vmatpush1.msra.mxu0 0.0
  %79 = vmatprep.subr.mxu0 0.0
  %80 = vmatpush1.msra.mxu0 0.0
  %81 = vmatprep.subr.mxu0 0.0
  %82 = vmatpush1.msra.mxu0 0.0
  %83 = vmatprep.subr.mxu0 0.0
  %84 = vmatpush1.msra.mxu0 0.0
  %85 = vmatprep.subr.mxu0 0.0
  %86 = vmatpush1.msra.mxu0 0.0
  %87 = vmatprep.subr.mxu0 0.0
  %88 = vmatpush1.msra.mxu0 0.0
  %89 = vmatprep.subr.mxu0 0.0
  %90 = vmatpush1.msra.mxu0 0.0
  %91 = vmatprep.subr.mxu0 0.0
  %92 = vmatpush1.msra.mxu0 0.0
  %93 = vmatprep.subr.mxu0 0.0
  %94 = vmatpush1.msra.mxu0 0.0
  %95 = vmatprep.subr.mxu0 0.0
  %96 = vmatpush1.msra.mxu0 0.0
  %97 = vmatprep.subr.mxu0 0.0
  %98 = vmatpush1.msra.mxu0 0.0
  %99 = vmatprep.subr.mxu0 0.0
  %100 = vmatpush1.msra.mxu0 0.0
  %101 = vmatprep.subr.mxu0 0.0
  %102 = vmatpush1.msra.mxu0 0.0
  %103 = vmatprep.subr.mxu0 0.0
  %104 = vmatpush1.msra.mxu0 0.0
  %105 = vmatprep.subr.mxu0 0.0
  %106 = vmatpush1.msra.mxu0 0.0
  %107 = vmatprep.subr.mxu0 0.0
  %108 = vmatpush1.msra.mxu0 0.0
  %109 = vmatprep.subr.mxu0 0.0
  %110 = vmatpush1.msra.mxu0 0.0
  %111 = vmatprep.subr.mxu0 0.0
  %112 = vmatpush1.msra.mxu0 0.0
  %113 = vmatprep.subr.mxu0 0.0
  %114 = vmatpush1.msra.mxu0 0.0
  %115 = vmatprep.subr.mxu0 0.0
  %116 = vmatpush1.msra.mxu0 0.0
  %117 = vmatprep.subr.mxu0 0.0
  %118 = vmatpush1.msra.mxu0 0.0
  %119 = vmatprep.subr.mxu0 0.0
  %120 = vmatpush1.msra.mxu0 0.0
  %121 = vmatprep.subr.mxu0 0.0
  %122 = vmatpush1.msra.mxu0 0.0
  %123 = vmatprep.subr.mxu0 0.0
  %124 = vmatpush1.msra.mxu0 0.0
  %125 = vmatprep.subr.mxu0 0.0
  %126 = vmatpush1.msra.mxu0 0.0
  %127 = vmatprep.subr.mxu0 0.0
  %128 = vmatpush1.msra.mxu0 0.0
  %129 = vmatprep.subr.mxu0 0.0
  %130 = vmatpush1.msra.mxu0 0.0
  %131 = vmatprep.subr.mxu0 0.0
  %132 = vmatpush1.msra.mxu0 0.0
  %133 = vmatprep.subr.mxu0 0.0
  %134 = vmatpush1.msra.mxu0 0.0
  %135 = vmatprep.subr.mxu0 0.0
  %136 = vmatpush1.msra.mxu0 0.0
  %137 = vmatprep.mubr.f32.mxu0 0.0
  %138 = vmatmul.mubr.f32.gmra.mrb[0].mxu0 %v50
  %v139 = vpop.f32.mrb[0].mxu0
  %v140 = vadd.f32 %v46, %v139
  %v141 = vpop.f32.mrb[0].mxu0
  %142 = vmatprep.mubr.f32.mxu0 0.0
  %143 = vmatmul.mubr.f32.gmra.mrb[0].mxu0 %v53
  %v144 = vpop.f32.mrb[0].mxu0
  %v145 = vadd.f32 %v46, %v144
  %v146 = vpop.f32.mrb[0].mxu0
  %147 = vmatprep.mubr.f32.mxu0 0.0
  %148 = vmatmul.mubr.f32.gmra.mrb[0].mxu0 %v56
  %v149 = vpop.f32.mrb[0].mxu0
  %v150 = vadd.f32 %v46, %v149
  %v151 = vpop.f32.mrb[0].mxu0
  %152 = vmatprep.mubr.f32.mxu0 0.0
  %153 = vmatmul.mubr.f32.gmra.mrb[0].mxu0 %v59
  %v154 = vpop.f32.mrb[0].mxu0
  %v155 = vadd.f32 %v46, %v154
  %v156 = vpop.f32.mrb[0].mxu0
  %157 = vmatprep.mubr.f32.mxu0 0.0
  %158 = vmatmul.mubr.f32.gmra.mrb[0].mxu0 %v62
  %v159 = vpop.f32.mrb[0].mxu0
  %v160 = vadd.f32 %v46, %v159
  %v161 = vpop.f32.mrb[0].mxu0
  %162 = vmatprep.mubr.f32.mxu0 0.0
  %163 = vmatmul.mubr.f32.gmra.mrb[0].mxu0 %v65
  %v164 = vpop.f32.mrb[0].mxu0
  %v165 = vadd.f32 %v46, %v164
  %v166 = vpop.f32.mrb[0].mxu0
  %167 = vmatprep.mubr.f32.mxu0 0.0
  %168 = vmatmul.mubr.f32.gmra.mrb[0].mxu0 %v68
  %v169 = vpop.f32.mrb[0].mxu0
  %v170 = vadd.f32 %v46, %v169
  %v171 = vpop.f32.mrb[0].mxu0
  %172 = vmatprep.mubr.f32.mxu0 0.0
  %173 = vmatmul.mubr.f32.gmra.mrb[0].mxu0 %v71
  %v174 = vpop.f32.mrb[0].mxu0
  %v175 = vadd.f32 %v46, %v174
  %v176 = vpop.f32.mrb[0].mxu0
  %177 = vdwg.mxu0
  %v178 = vld [vmem:[%s4] sm:$0x1]
  %v179 = vld [vmem:[%s3] sm:$0xff]
  %v180 = vld [vmem:[%s3 + $0x8] sm:$0xff]
  %v181 = vld [vmem:[%s3 + $0x10] sm:$0xff]
  %v182 = vld [vmem:[%s3 + $0x18] sm:$0xff]
  %v183 = vld [vmem:[%s3 + $0x20] sm:$0xff]
  %v184 = vld [vmem:[%s3 + $0x28] sm:$0xff]
  %v185 = vld [vmem:[%s3 + $0x30] sm:$0xff]
  %v186 = vld [vmem:[%s3 + $0x38] sm:$0xff]
  %v187 = vld [vmem:[%s3 + $0x40] sm:$0xff]
  %v188 = vld [vmem:[%s3 + $0x48] sm:$0xff]
  %v189 = vld [vmem:[%s3 + $0x50] sm:$0xff]
  %v190 = vld [vmem:[%s3 + $0x58] sm:$0xff]
  %v191 = vmul.f32 %v140, 0.5
  %v192 = vsel %vm30, %v140, %v191
  %v193 = vtanh.pop %v192
  %v194 = vmul.f32 %v193, 0.5
  %v195 = vadd.f32 %v194, 0.5
  %v196 = vsel %vm30, %v193, %v195
  %v197 = vmul.f32 %v196, 0.0
  %199 = vrot.lane.b32.xlu0 %v196, 64
  %v200 = vpop.permute.xlu0 %199
  %v202 = vmul.f32 %v196, %v200
  %204 = vrot.lane.b32.xlu0 %v202, 32
  %v205 = vpop.permute.xlu0 %204
  %v207 = vadd.f32 %v197, %v205
  %v208 = vtanh.pop %v207
  %210 = vrot.lane.b32.xlu0 %v208, 64
  %v211 = vpop.permute.xlu0 %210
  %v213 = vmul.f32 %v196, %v211
  %216 = vrot.lane.b32.xlu0 %v213, 32
  %v217 = vpop.permute.xlu0 %216
  %218 = vrot.lane.b32.xlu0 0.0, 32
  %v219 = vpop.permute.xlu0 %218
  %vm220 = vcmask 261120
  %v221 = vsel %vm220, %v217, 0
  %v223 = vsel %vm220, %v219, 0
  %225 = vmatprep.subr.mxu0 %v180
  %226 = vmatpush1.msra.mxu0 %v179
  %227 = vmatprep.subr.mxu0 %v183
  %228 = vmatpush1.msra.mxu0 %v182
  %229 = vmatprep.subr.mxu0 %v186
  %230 = vmatpush1.msra.mxu0 %v185
  %231 = vmatprep.subr.mxu0 %v189
  %232 = vmatpush1.msra.mxu0 %v188
  %233 = vmatprep.subr.mxu0 0.0
  %234 = vmatpush1.msra.mxu0 0.0
  %235 = vmatprep.subr.mxu0 0.0
  %236 = vmatpush1.msra.mxu0 0.0
  %237 = vmatprep.subr.mxu0 0.0
  %238 = vmatpush1.msra.mxu0 0.0
  %239 = vmatprep.subr.mxu0 0.0
  %240 = vmatpush1.msra.mxu0 0.0
  %241 = vmatprep.subr.mxu0 0.0
  %242 = vmatpush1.msra.mxu0 0.0
  %243 = vmatprep.subr.mxu0 0.0
  %244 = vmatpush1.msra.mxu0 0.0
  %245 = vmatprep.subr.mxu0 0.0
  %246 = vmatpush1.msra.mxu0 0.0
  %247 = vmatprep.subr.mxu0 0.0
  %248 = vmatpush1.msra.mxu0 0.0
  %249 = vmatprep.subr.mxu0 0.0
  %250 = vmatpush1.msra.mxu0 0.0
  %251 = vmatprep.subr.mxu0 0.0
  %252 = vmatpush1.msra.mxu0 0.0
  %253 = vmatprep.subr.mxu0 0.0
  %254 = vmatpush1.msra.mxu0 0.0
  %255 = vmatprep.subr.mxu0 0.0
  %256 = vmatpush1.msra.mxu0 0.0
  %257 = vmatprep.subr.mxu0 0.0
  %258 = vmatpush1.msra.mxu0 0.0
  %259 = vmatprep.subr.mxu0 0.0
  %260 = vmatpush1.msra.mxu0 0.0
  %261 = vmatprep.subr.mxu0 0.0
  %262 = vmatpush1.msra.mxu0 0.0
  %263 = vmatprep.subr.mxu0 0.0
  %264 = vmatpush1.msra.mxu0 0.0
  %265 = vmatprep.subr.mxu0 0.0
  %266 = vmatpush1.msra.mxu0 0.0
  %267 = vmatprep.subr.mxu0 0.0
  %268 = vmatpush1.msra.mxu0 0.0
  %269 = vmatprep.subr.mxu0 0.0
  %270 = vmatpush1.msra.mxu0 0.0
  %271 = vmatprep.subr.mxu0 0.0
  %272 = vmatpush1.msra.mxu0 0.0
  %273 = vmatprep.subr.mxu0 0.0
  %274 = vmatpush1.msra.mxu0 0.0
  %275 = vmatprep.subr.mxu0 0.0
  %276 = vmatpush1.msra.mxu0 0.0
  %277 = vmatprep.subr.mxu0 0.0
  %278 = vmatpush1.msra.mxu0 0.0
  %279 = vmatprep.subr.mxu0 0.0
  %280 = vmatpush1.msra.mxu0 0.0
  %281 = vmatprep.subr.mxu0 0.0
  %282 = vmatpush1.msra.mxu0 0.0
  %283 = vmatprep.subr.mxu0 0.0
  %284 = vmatpush1.msra.mxu0 0.0
  %285 = vmatprep.subr.mxu0 0.0
  %286 = vmatpush1.msra.mxu0 0.0
  %287 = vmatprep.subr.mxu0 0.0
  %288 = vmatpush1.msra.mxu0 0.0
  %289 = vmatprep.mubr.f32.mxu0 0.0
  %290 = vmatmul.mubr.f32.gmra.mrb[0].mxu0 %v221
  %v291 = vpop.f32.mrb[0].mxu0
  %v292 = vadd.f32 0.0, %v291
  %v293 = vpop.f32.mrb[0].mxu0
  %v294 = vadd.f32 0.0, %v293
  %295 = vmatprep.mubr.f32.mxu0 0.0
  %296 = vmatmul.mubr.f32.gmra.mrb[0].mxu0 %v223
  %v297 = vpop.f32.mrb[0].mxu0
  %v298 = vpop.f32.mrb[0].mxu0
  %299 = vdwg.mxu0
  %300 = vmatprep.subr.mxu0 0.0
  %301 = vmatpush1.msra.mxu0 %v181
  %302 = vmatprep.subr.mxu0 0.0
  %303 = vmatpush1.msra.mxu0 %v184
  %304 = vmatprep.subr.mxu0 0.0
  %305 = vmatpush1.msra.mxu0 %v187
  %306 = vmatprep.subr.mxu0 0.0
  %307 = vmatpush1.msra.mxu0 %v190
  %308 = vmatprep.subr.mxu0 0.0
  %309 = vmatpush1.msra.mxu0 0.0
  %310 = vmatprep.subr.mxu0 0.0
  %311 = vmatpush1.msra.mxu0 0.0
  %312 = vmatprep.subr.mxu0 0.0
  %313 = vmatpush1.msra.mxu0 0.0
  %314 = vmatprep.subr.mxu0 0.0
  %315 = vmatpush1.msra.mxu0 0.0
  %316 = vmatprep.subr.mxu0 0.0
  %317 = vmatpush1.msra.mxu0 0.0
  %318 = vmatprep.subr.mxu0 0.0
  %319 = vmatpush1.msra.mxu0 0.0
  %320 = vmatprep.subr.mxu0 0.0
  %321 = vmatpush1.msra.mxu0 0.0
  %322 = vmatprep.subr.mxu0 0.0
  %323 = vmatpush1.msra.mxu0 0.0
  %324 = vmatprep.subr.mxu0 0.0
  %325 = vmatpush1.msra.mxu0 0.0
  %326 = vmatprep.subr.mxu0 0.0
  %327 = vmatpush1.msra.mxu0 0.0
  %328 = vmatprep.subr.mxu0 0.0
  %329 = vmatpush1.msra.mxu0 0.0
  %330 = vmatprep.subr.mxu0 0.0
  %331 = vmatpush1.msra.mxu0 0.0
  %332 = vmatprep.subr.mxu0 0.0
  %333 = vmatpush1.msra.mxu0 0.0
  %334 = vmatprep.subr.mxu0 0.0
  %335 = vmatpush1.msra.mxu0 0.0
  %336 = vmatprep.subr.mxu0 0.0
  %337 = vmatpush1.msra.mxu0 0.0
  %338 = vmatprep.subr.mxu0 0.0
  %339 = vmatpush1.msra.mxu0 0.0
  %340 = vmatprep.subr.mxu0 0.0
  %341 = vmatpush1.msra.mxu0 0.0
  %342 = vmatprep.subr.mxu0 0.0
  %343 = vmatpush1.msra.mxu0 0.0
  %344 = vmatprep.subr.mxu0 0.0
  %345 = vmatpush1.msra.mxu0 0.0
  %346 = vmatprep.subr.mxu0 0.0
  %347 = vmatpush1.msra.mxu0 0.0
  %348 = vmatprep.subr.mxu0 0.0
  %349 = vmatpush1.msra.mxu0 0.0
  %350 = vmatprep.subr.mxu0 0.0
  %351 = vmatpush1.msra.mxu0 0.0
  %352 = vmatprep.subr.mxu0 0.0
  %353 = vmatpush1.msra.mxu0 0.0
  %354 = vmatprep.subr.mxu0 0.0
  %355 = vmatpush1.msra.mxu0 0.0
  %356 = vmatprep.subr.mxu0 0.0
  %357 = vmatpush1.msra.mxu0 0.0
  %358 = vmatprep.subr.mxu0 0.0
  %359 = vmatpush1.msra.mxu0 0.0
  %360 = vmatprep.subr.mxu0 0.0
  %361 = vmatpush1.msra.mxu0 0.0
  %362 = vmatprep.subr.mxu0 0.0
  %363 = vmatpush1.msra.mxu0 0.0
  %364 = vmatprep.mubr.f32.mxu0 0.0
  %365 = vmatmul.mubr.f32.gmra.mrb[0].mxu0 %v221
  %v366 = vpop.f32.mrb[0].mxu0
  %v367 = vpop.f32.mrb[0].mxu0
  %368 = vmatprep.mubr.f32.mxu0 0.0
  %369 = vmatmul.mubr.f32.gmra.mrb[0].mxu0 %v223
  %v370 = vpop.f32.mrb[0].mxu0
  %v371 = vadd.f32 0.0, %v370
  %v372 = vpop.f32.mrb[0].mxu0
  %373 = vdwg.mxu0
  %v374 = vadd.f32 %v145, %v292
  %v376 = vlaneseq
  %v377 = vshrl.u32 %v376, 7
  %v378 = vsub.s32 0, %v377
  %v379 = vrot.slane %v178, %v378
  %v381 = vadd.f32 %v294, %v379
  %v382 = vadd.f32 %v381, %v371
  %v383 = vmul.f32 %v374, 0.5
  %v384 = vmul.f32 %v382, 0.5
  %v385 = vsel %vm30, %v374, %v383
  %v386 = vsel %vm30, %v382, %v384
  %v387 = vtanh.pop %v385
  %v388 = vtanh.pop %v386
  %v389 = vmul.f32 %v387, 0.5
  %v390 = vmul.f32 %v388, 0.5
  %v391 = vadd.f32 %v389, 0.5
  %v392 = vadd.f32 %v390, 0.5
  %v393 = vsel %vm30, %v387, %v391
  %v394 = vsel %vm30, %v388, %v392
  %v395 = vmul.f32 %v393, %v207
  %v396 = vmul.f32 %v394, 0.0
  %399 = vrot.lane.b32.xlu0 %v393, 64
  %v400 = vpop.permute.xlu0 %399
  %401 = vrot.lane.b32.xlu0 %v394, 64
  %v402 = vpop.permute.xlu0 %401
  %v405 = vmul.f32 %v393, %v400
  %v406 = vmul.f32 %v394, %v402
  %409 = vrot.lane.b32.xlu0 %v405, 32
  %v410 = vpop.permute.xlu0 %409
  %411 = vrot.lane.b32.xlu0 %v406, 32
  %v412 = vpop.permute.xlu0 %411
  %v415 = vadd.f32 %v395, %v410
  %v416 = vadd.f32 %v396, %v412
  %v417 = vtanh.pop %v415
  %v418 = vtanh.pop %v416
  %421 = vrot.lane.b32.xlu0 %v417, 64
  %v422 = vpop.permute.xlu0 %421
  %423 = vrot.lane.b32.xlu0 %v418, 64
  %v424 = vpop.permute.xlu0 %423
  %v427 = vmul.f32 %v393, %v422
  %v428 = vmul.f32 %v394, %v424
  %431 = vrot.lane.b32.xlu0 %v427, 32
  %v432 = vpop.permute.xlu0 %431
  %433 = vrot.lane.b32.xlu0 %v428, 32
  %v434 = vpop.permute.xlu0 %433
  %v435 = vsel %vm220, %v432, 0
  %v437 = vsel %vm220, %v434, 0
  %439 = vmatprep.subr.mxu0 %v180
  %440 = vmatpush1.msra.mxu0 %v179
  %441 = vmatprep.subr.mxu0 %v183
  %442 = vmatpush1.msra.mxu0 %v182
  %443 = vmatprep.subr.mxu0 %v186
  %444 = vmatpush1.msra.mxu0 %v185
  %445 = vmatprep.subr.mxu0 %v189
  %446 = vmatpush1.msra.mxu0 %v188
  %447 = vmatprep.subr.mxu0 0.0
  %448 = vmatpush1.msra.mxu0 0.0
  %449 = vmatprep.subr.mxu0 0.0
  %450 = vmatpush1.msra.mxu0 0.0
  %451 = vmatprep.subr.mxu0 0.0
  %452 = vmatpush1.msra.mxu0 0.0
  %453 = vmatprep.subr.mxu0 0.0
  %454 = vmatpush1.msra.mxu0 0.0
  %455 = vmatprep.subr.mxu0 0.0
  %456 = vmatpush1.msra.mxu0 0.0
  %457 = vmatprep.subr.mxu0 0.0
  %458 = vmatpush1.msra.mxu0 0.0
  %459 = vmatprep.subr.mxu0 0.0
  %460 = vmatpush1.msra.mxu0 0.0
  %461 = vmatprep.subr.mxu0 0.0
  %462 = vmatpush1.msra.mxu0 0.0
  %463 = vmatprep.subr.mxu0 0.0
  %464 = vmatpush1.msra.mxu0 0.0
  %465 = vmatprep.subr.mxu0 0.0
  %466 = vmatpush1.msra.mxu0 0.0
  %467 = vmatprep.subr.mxu0 0.0
  %468 = vmatpush1.msra.mxu0 0.0
  %469 = vmatprep.subr.mxu0 0.0
  %470 = vmatpush1.msra.mxu0 0.0
  %471 = vmatprep.subr.mxu0 0.0
  %472 = vmatpush1.msra.mxu0 0.0
  %473 = vmatprep.subr.mxu0 0.0
  %474 = vmatpush1.msra.mxu0 0.0
  %475 = vmatprep.subr.mxu0 0.0
  %476 = vmatpush1.msra.mxu0 0.0
  %477 = vmatprep.subr.mxu0 0.0
  %478 = vmatpush1.msra.mxu0 0.0
  %479 = vmatprep.subr.mxu0 0.0
  %480 = vmatpush1.msra.mxu0 0.0
  %481 = vmatprep.subr.mxu0 0.0
  %482 = vmatpush1.msra.mxu0 0.0
  %483 = vmatprep.subr.mxu0 0.0
  %484 = vmatpush1.msra.mxu0 0.0
  %485 = vmatprep.subr.mxu0 0.0
  %486 = vmatpush1.msra.mxu0 0.0
  %487 = vmatprep.subr.mxu0 0.0
  %488 = vmatpush1.msra.mxu0 0.0
  %489 = vmatprep.subr.mxu0 0.0
  %490 = vmatpush1.msra.mxu0 0.0
  %491 = vmatprep.subr.mxu0 0.0
  %492 = vmatpush1.msra.mxu0 0.0
  %493 = vmatprep.subr.mxu0 0.0
  %494 = vmatpush1.msra.mxu0 0.0
  %495 = vmatprep.subr.mxu0 0.0
  %496 = vmatpush1.msra.mxu0 0.0
  %497 = vmatprep.subr.mxu0 0.0
  %498 = vmatpush1.msra.mxu0 0.0
  %499 = vmatprep.subr.mxu0 0.0
  %500 = vmatpush1.msra.mxu0 0.0
  %501 = vmatprep.subr.mxu0 0.0
  %502 = vmatpush1.msra.mxu0 0.0
  %503 = vmatprep.mubr.f32.mxu0 0.0
  %504 = vmatmul.mubr.f32.gmra.mrb[0].mxu0 %v435
  %v505 = vpop.f32.mrb[0].mxu0
  %v506 = vadd.f32 0.0, %v505
  %v507 = vpop.f32.mrb[0].mxu0
  %v508 = vadd.f32 0.0, %v507
  %509 = vmatprep.mubr.f32.mxu0 0.0
  %510 = vmatmul.mubr.f32.gmra.mrb[0].mxu0 %v437
  %v511 = vpop.f32.mrb[0].mxu0
  %v512 = vpop.f32.mrb[0].mxu0
  %513 = vdwg.mxu0
  %514 = vmatprep.subr.mxu0 0.0
  %515 = vmatpush1.msra.mxu0 %v181
  %516 = vmatprep.subr.mxu0 0.0
  %517 = vmatpush1.msra.mxu0 %v184
  %518 = vmatprep.subr.mxu0 0.0
  %519 = vmatpush1.msra.mxu0 %v187
  %520 = vmatprep.subr.mxu0 0.0
  %521 = vmatpush1.msra.mxu0 %v190
  %522 = vmatprep.subr.mxu0 0.0
  %523 = vmatpush1.msra.mxu0 0.0
  %524 = vmatprep.subr.mxu0 0.0
  %525 = vmatpush1.msra.mxu0 0.0
  %526 = vmatprep.subr.mxu0 0.0
  %527 = vmatpush1.msra.mxu0 0.0
  %528 = vmatprep.subr.mxu0 0.0
  %529 = vmatpush1.msra.mxu0 0.0
  %530 = vmatprep.subr.mxu0 0.0
  %531 = vmatpush1.msra.mxu0 0.0
  %532 = vmatprep.subr.mxu0 0.0
  %533 = vmatpush1.msra.mxu0 0.0
  %534 = vmatprep.subr.mxu0 0.0
  %535 = vmatpush1.msra.mxu0 0.0
  %536 = vmatprep.subr.mxu0 0.0
  %537 = vmatpush1.msra.mxu0 0.0
  %538 = vmatprep.subr.mxu0 0.0
  %539 = vmatpush1.msra.mxu0 0.0
  %540 = vmatprep.subr.mxu0 0.0
  %541 = vmatpush1.msra.mxu0 0.0
  %542 = vmatprep.subr.mxu0 0.0
  %543 = vmatpush1.msra.mxu0 0.0
  %544 = vmatprep.subr.mxu0 0.0
  %545 = vmatpush1.msra.mxu0 0.0
  %546 = vmatprep.subr.mxu0 0.0
  %547 = vmatpush1.msra.mxu0 0.0
  %548 = vmatprep.subr.mxu0 0.0
  %549 = vmatpush1.msra.mxu0 0.0
  %550 = vmatprep.subr.mxu0 0.0
  %551 = vmatpush1.msra.mxu0 0.0
  %552 = vmatprep.subr.mxu0 0.0
  %553 = vmatpush1.msra.mxu0 0.0
  %554 = vmatprep.subr.mxu0 0.0
  %555 = vmatpush1.msra.mxu0 0.0
  %556 = vmatprep.subr.mxu0 0.0
  %557 = vmatpush1.msra.mxu0 0.0
  %558 = vmatprep.subr.mxu0 0.0
  %559 = vmatpush1.msra.mxu0 0.0
  %560 = vmatprep.subr.mxu0 0.0
  %561 = vmatpush1.msra.mxu0 0.0
  %562 = vmatprep.subr.mxu0 0.0
  %563 = vmatpush1.msra.mxu0 0.0
  %564 = vmatprep.subr.mxu0 0.0
  %565 = vmatpush1.msra.mxu0 0.0
  %566 = vmatprep.subr.mxu0 0.0
  %567 = vmatpush1.msra.mxu0 0.0
  %568 = vmatprep.subr.mxu0 0.0
  %569 = vmatpush1.msra.mxu0 0.0
  %570 = vmatprep.subr.mxu0 0.0
  %571 = vmatpush1.msra.mxu0 0.0
  %572 = vmatprep.subr.mxu0 0.0
  %573 = vmatpush1.msra.mxu0 0.0
  %574 = vmatprep.subr.mxu0 0.0
  %575 = vmatpush1.msra.mxu0 0.0
  %576 = vmatprep.subr.mxu0 0.0
  %577 = vmatpush1.msra.mxu0 0.0
  %578 = vmatprep.mubr.f32.mxu0 0.0
  %579 = vmatmul.mubr.f32.gmra.mrb[0].mxu0 %v435
  %v580 = vpop.f32.mrb[0].mxu0
  %v581 = vpop.f32.mrb[0].mxu0
  %582 = vmatprep.mubr.f32.mxu0 0.0
  %583 = vmatmul.mubr.f32.gmra.mrb[0].mxu0 %v437
  %v584 = vpop.f32.mrb[0].mxu0
  %v585 = vadd.f32 0.0, %v584
  %v586 = vpop.f32.mrb[0].mxu0
  %587 = vdwg.mxu0
  %v588 = vadd.f32 %v150, %v506
  %v589 = vadd.f32 %v508, %v379
  %v590 = vadd.f32 %v589, %v585
  %v591 = vmul.f32 %v588, 0.5
  %v592 = vmul.f32 %v590, 0.5
  %v593 = vsel %vm30, %v588, %v591
  %v594 = vsel %vm30, %v590, %v592
  %v595 = vtanh.pop %v593
  %v596 = vtanh.pop %v594
  %v597 = vmul.f32 %v595, 0.5
  %v598 = vmul.f32 %v596, 0.5
  %v599 = vadd.f32 %v597, 0.5
  %v600 = vadd.f32 %v598, 0.5
  %v601 = vsel %vm30, %v595, %v599
  %v602 = vsel %vm30, %v596, %v600
  %v603 = vmul.f32 %v601, %v415
  %v604 = vmul.f32 %v602, %v416
  %607 = vrot.lane.b32.xlu0 %v601, 64
  %v608 = vpop.permute.xlu0 %607
  %609 = vrot.lane.b32.xlu0 %v602, 64
  %v610 = vpop.permute.xlu0 %609
  %v613 = vmul.f32 %v601, %v608
  %v614 = vmul.f32 %v602, %v610
  %617 = vrot.lane.b32.xlu0 %v613, 32
  %v618 = vpop.permute.xlu0 %617
  %619 = vrot.lane.b32.xlu0 %v614, 32
  %v620 = vpop.permute.xlu0 %619
  %v623 = vadd.f32 %v603, %v618
  %v624 = vadd.f32 %v604, %v620
  %v625 = vtanh.pop %v623
  %v626 = vtanh.pop %v624
  %629 = vrot.lane.b32.xlu0 %v625, 64
  %v630 = vpop.permute.xlu0 %629
  %631 = vrot.lane.b32.xlu0 %v626, 64
  %v632 = vpop.permute.xlu0 %631
  %v635 = vmul.f32 %v601, %v630
  %v636 = vmul.f32 %v602, %v632
  %639 = vrot.lane.b32.xlu0 %v635, 32
  %v640 = vpop.permute.xlu0 %639
  %641 = vrot.lane.b32.xlu0 %v636, 32
  %v642 = vpop.permute.xlu0 %641
  %v643 = vsel %vm220, %v640, 0
  %v645 = vsel %vm220, %v642, 0
  %647 = vmatprep.subr.mxu0 %v180
  %648 = vmatpush1.msra.mxu0 %v179
  %649 = vmatprep.subr.mxu0 %v183
  %650 = vmatpush1.msra.mxu0 %v182
  %651 = vmatprep.subr.mxu0 %v186
  %652 = vmatpush1.msra.mxu0 %v185
  %653 = vmatprep.subr.mxu0 %v189
  %654 = vmatpush1.msra.mxu0 %v188
  %655 = vmatprep.subr.mxu0 0.0
  %656 = vmatpush1.msra.mxu0 0.0
  %657 = vmatprep.subr.mxu0 0.0
  %658 = vmatpush1.msra.mxu0 0.0
  %659 = vmatprep.subr.mxu0 0.0
  %660 = vmatpush1.msra.mxu0 0.0
  %661 = vmatprep.subr.mxu0 0.0
  %662 = vmatpush1.msra.mxu0 0.0
  %663 = vmatprep.subr.mxu0 0.0
  %664 = vmatpush1.msra.mxu0 0.0
  %665 = vmatprep.subr.mxu0 0.0
  %666 = vmatpush1.msra.mxu0 0.0
  %667 = vmatprep.subr.mxu0 0.0
  %668 = vmatpush1.msra.mxu0 0.0
  %669 = vmatprep.subr.mxu0 0.0
  %670 = vmatpush1.msra.mxu0 0.0
  %671 = vmatprep.subr.mxu0 0.0
  %672 = vmatpush1.msra.mxu0 0.0
  %673 = vmatprep.subr.mxu0 0.0
  %674 = vmatpush1.msra.mxu0 0.0
  %675 = vmatprep.subr.mxu0 0.0
  %676 = vmatpush1.msra.mxu0 0.0
  %677 = vmatprep.subr.mxu0 0.0
  %678 = vmatpush1.msra.mxu0 0.0
  %679 = vmatprep.subr.mxu0 0.0
  %680 = vmatpush1.msra.mxu0 0.0
  %681 = vmatprep.subr.mxu0 0.0
  %682 = vmatpush1.msra.mxu0 0.0
  %683 = vmatprep.subr.mxu0 0.0
  %684 = vmatpush1.msra.mxu0 0.0
  %685 = vmatprep.subr.mxu0 0.0
  %686 = vmatpush1.msra.mxu0 0.0
  %687 = vmatprep.subr.mxu0 0.0
  %688 = vmatpush1.msra.mxu0 0.0
  %689 = vmatprep.subr.mxu0 0.0
  %690 = vmatpush1.msra.mxu0 0.0
  %691 = vmatprep.subr.mxu0 0.0
  %692 = vmatpush1.msra.mxu0 0.0
  %693 = vmatprep.subr.mxu0 0.0
  %694 = vmatpush1.msra.mxu0 0.0
  %695 = vmatprep.subr.mxu0 0.0
  %696 = vmatpush1.msra.mxu0 0.0
  %697 = vmatprep.subr.mxu0 0.0
  %698 = vmatpush1.msra.mxu0 0.0
  %699 = vmatprep.subr.mxu0 0.0
  %700 = vmatpush1.msra.mxu0 0.0
  %701 = vmatprep.subr.mxu0 0.0
  %702 = vmatpush1.msra.mxu0 0.0
  %703 = vmatprep.subr.mxu0 0.0
  %704 = vmatpush1.msra.mxu0 0.0
  %705 = vmatprep.subr.mxu0 0.0
  %706 = vmatpush1.msra.mxu0 0.0
  %707 = vmatprep.subr.mxu0 0.0
  %708 = vmatpush1.msra.mxu0 0.0
  %709 = vmatprep.subr.mxu0 0.0
  %710 = vmatpush1.msra.mxu0 0.0
  %711 = vmatprep.mubr.f32.mxu0 0.0
  %712 = vmatmul.mubr.f32.gmra.mrb[0].mxu0 %v643
  %v713 = vpop.f32.mrb[0].mxu0
  %v714 = vadd.f32 0.0, %v713
  %v715 = vpop.f32.mrb[0].mxu0
  %v716 = vadd.f32 0.0, %v715
  %717 = vmatprep.mubr.f32.mxu0 0.0
  %718 = vmatmul.mubr.f32.gmra.mrb[0].mxu0 %v645
  %v719 = vpop.f32.mrb[0].mxu0
  %v720 = vpop.f32.mrb[0].mxu0
  %721 = vdwg.mxu0
  %722 = vmatprep.subr.mxu0 0.0
  %723 = vmatpush1.msra.mxu0 %v181
  %724 = vmatprep.subr.mxu0 0.0
  %725 = vmatpush1.msra.mxu0 %v184
  %726 = vmatprep.subr.mxu0 0.0
  %727 = vmatpush1.msra.mxu0 %v187
  %728 = vmatprep.subr.mxu0 0.0
  %729 = vmatpush1.msra.mxu0 %v190
  %730 = vmatprep.subr.mxu0 0.0
  %731 = vmatpush1.msra.mxu0 0.0
  %732 = vmatprep.subr.mxu0 0.0
  %733 = vmatpush1.msra.mxu0 0.0
  %734 = vmatprep.subr.mxu0 0.0
  %735 = vmatpush1.msra.mxu0 0.0
  %736 = vmatprep.subr.mxu0 0.0
  %737 = vmatpush1.msra.mxu0 0.0
  %738 = vmatprep.subr.mxu0 0.0
  %739 = vmatpush1.msra.mxu0 0.0
  %740 = vmatprep.subr.mxu0 0.0
  %741 = vmatpush1.msra.mxu0 0.0
  %742 = vmatprep.subr.mxu0 0.0
  %743 = vmatpush1.msra.mxu0 0.0
  %744 = vmatprep.subr.mxu0 0.0
  %745 = vmatpush1.msra.mxu0 0.0
  %746 = vmatprep.subr.mxu0 0.0
  %747 = vmatpush1.msra.mxu0 0.0
  %748 = vmatprep.subr.mxu0 0.0
  %749 = vmatpush1.msra.mxu0 0.0
  %750 = vmatprep.subr.mxu0 0.0
  %751 = vmatpush1.msra.mxu0 0.0
  %752 = vmatprep.subr.mxu0 0.0
  %753 = vmatpush1.msra.mxu0 0.0
  %754 = vmatprep.subr.mxu0 0.0
  %755 = vmatpush1.msra.mxu0 0.0
  %756 = vmatprep.subr.mxu0 0.0
  %757 = vmatpush1.msra.mxu0 0.0
  %758 = vmatprep.subr.mxu0 0.0
  %759 = vmatpush1.msra.mxu0 0.0
  %760 = vmatprep.subr.mxu0 0.0
  %761 = vmatpush1.msra.mxu0 0.0
  %762 = vmatprep.subr.mxu0 0.0
  %763 = vmatpush1.msra.mxu0 0.0
  %764 = vmatprep.subr.mxu0 0.0
  %765 = vmatpush1.msra.mxu0 0.0
  %766 = vmatprep.subr.mxu0 0.0
  %767 = vmatpush1.msra.mxu0 0.0
  %768 = vmatprep.subr.mxu0 0.0
  %769 = vmatpush1.msra.mxu0 0.0
  %770 = vmatprep.subr.mxu0 0.0
  %771 = vmatpush1.msra.mxu0 0.0
  %772 = vmatprep.subr.mxu0 0.0
  %773 = vmatpush1.msra.mxu0 0.0
  %774 = vmatprep.subr.mxu0 0.0
  %775 = vmatpush1.msra.mxu0 0.0
  %776 = vmatprep.subr.mxu0 0.0
  %777 = vmatpush1.msra.mxu0 0.0
  %778 = vmatprep.subr.mxu0 0.0
  %779 = vmatpush1.msra.mxu0 0.0
  %780 = vmatprep.subr.mxu0 0.0
  %781 = vmatpush1.msra.mxu0 0.0
  %782 = vmatprep.subr.mxu0 0.0
  %783 = vmatpush1.msra.mxu0 0.0
  %784 = vmatprep.subr.mxu0 0.0
  %785 = vmatpush1.msra.mxu0 0.0
  %786 = vmatprep.mubr.f32.mxu0 0.0
  %787 = vmatmul.mubr.f32.gmra.mrb[0].mxu0 %v643
  %v788 = vpop.f32.mrb[0].mxu0
  %v789 = vpop.f32.mrb[0].mxu0
  %790 = vmatprep.mubr.f32.mxu0 0.0
  %791 = vmatmul.mubr.f32.gmra.mrb[0].mxu0 %v645
  %v792 = vpop.f32.mrb[0].mxu0
  %v793 = vadd.f32 0.0, %v792
  %v794 = vpop.f32.mrb[0].mxu0
  %795 = vdwg.mxu0
  %v796 = vadd.f32 %v155, %v714
  %v797 = vadd.f32 %v716, %v379
  %v798 = vadd.f32 %v797, %v793
  %v799 = vmul.f32 %v796, 0.5
  %v800 = vmul.f32 %v798, 0.5
  %v801 = vsel %vm30, %v796, %v799
  %v802 = vsel %vm30, %v798, %v800
  %v803 = vtanh.pop %v801
  %v804 = vtanh.pop %v802
  %v805 = vmul.f32 %v803, 0.5
  %v806 = vmul.f32 %v804, 0.5
  %v807 = vadd.f32 %v805, 0.5
  %v808 = vadd.f32 %v806, 0.5
  %v809 = vsel %vm30, %v803, %v807
  %v810 = vsel %vm30, %v804, %v808
  %v811 = vmul.f32 %v809, %v623
  %v812 = vmul.f32 %v810, %v624
  %815 = vrot.lane.b32.xlu0 %v809, 64
  %v816 = vpop.permute.xlu0 %815
  %817 = vrot.lane.b32.xlu0 %v810, 64
  %v818 = vpop.permute.xlu0 %817
  %v821 = vmul.f32 %v809, %v816
  %v822 = vmul.f32 %v810, %v818
  %825 = vrot.lane.b32.xlu0 %v821, 32
  %v826 = vpop.permute.xlu0 %825
  %827 = vrot.lane.b32.xlu0 %v822, 32
  %v828 = vpop.permute.xlu0 %827
  %v831 = vadd.f32 %v811, %v826
  %v832 = vadd.f32 %v812, %v828
  %v833 = vtanh.pop %v831
  %v834 = vtanh.pop %v832
  %837 = vrot.lane.b32.xlu0 %v833, 64
  %v838 = vpop.permute.xlu0 %837
  %839 = vrot.lane.b32.xlu0 %v834, 64
  %v840 = vpop.permute.xlu0 %839
  %v843 = vmul.f32 %v809, %v838
  %v844 = vmul.f32 %v810, %v840
  %847 = vrot.lane.b32.xlu0 %v843, 32
  %v848 = vpop.permute.xlu0 %847
  %849 = vrot.lane.b32.xlu0 %v844, 32
  %v850 = vpop.permute.xlu0 %849
  %v851 = vsel %vm220, %v848, 0
  %v853 = vsel %vm220, %v850, 0
  %855 = vmatprep.subr.mxu0 %v180
  %856 = vmatpush1.msra.mxu0 %v179
  %857 = vmatprep.subr.mxu0 %v183
  %858 = vmatpush1.msra.mxu0 %v182
  %859 = vmatprep.subr.mxu0 %v186
  %860 = vmatpush1.msra.mxu0 %v185
  %861 = vmatprep.subr.mxu0 %v189
  %862 = vmatpush1.msra.mxu0 %v188
  %863 = vmatprep.subr.mxu0 0.0
  %864 = vmatpush1.msra.mxu0 0.0
  %865 = vmatprep.subr.mxu0 0.0
  %866 = vmatpush1.msra.mxu0 0.0
  %867 = vmatprep.subr.mxu0 0.0
  %868 = vmatpush1.msra.mxu0 0.0
  %869 = vmatprep.subr.mxu0 0.0
  %870 = vmatpush1.msra.mxu0 0.0
  %871 = vmatprep.subr.mxu0 0.0
  %872 = vmatpush1.msra.mxu0 0.0
  %873 = vmatprep.subr.mxu0 0.0
  %874 = vmatpush1.msra.mxu0 0.0
  %875 = vmatprep.subr.mxu0 0.0
  %876 = vmatpush1.msra.mxu0 0.0
  %877 = vmatprep.subr.mxu0 0.0
  %878 = vmatpush1.msra.mxu0 0.0
  %879 = vmatprep.subr.mxu0 0.0
  %880 = vmatpush1.msra.mxu0 0.0
  %881 = vmatprep.subr.mxu0 0.0
  %882 = vmatpush1.msra.mxu0 0.0
  %883 = vmatprep.subr.mxu0 0.0
  %884 = vmatpush1.msra.mxu0 0.0
  %885 = vmatprep.subr.mxu0 0.0
  %886 = vmatpush1.msra.mxu0 0.0
  %887 = vmatprep.subr.mxu0 0.0
  %888 = vmatpush1.msra.mxu0 0.0
  %889 = vmatprep.subr.mxu0 0.0
  %890 = vmatpush1.msra.mxu0 0.0
  %891 = vmatprep.subr.mxu0 0.0
  %892 = vmatpush1.msra.mxu0 0.0
  %893 = vmatprep.subr.mxu0 0.0
  %894 = vmatpush1.msra.mxu0 0.0
  %895 = vmatprep.subr.mxu0 0.0
  %896 = vmatpush1.msra.mxu0 0.0
  %897 = vmatprep.subr.mxu0 0.0
  %898 = vmatpush1.msra.mxu0 0.0
  %899 = vmatprep.subr.mxu0 0.0
  %900 = vmatpush1.msra.mxu0 0.0
  %901 = vmatprep.subr.mxu0 0.0
  %902 = vmatpush1.msra.mxu0 0.0
  %903 = vmatprep.subr.mxu0 0.0
  %904 = vmatpush1.msra.mxu0 0.0
  %905 = vmatprep.subr.mxu0 0.0
  %906 = vmatpush1.msra.mxu0 0.0
  %907 = vmatprep.subr.mxu0 0.0
  %908 = vmatpush1.msra.mxu0 0.0
  %909 = vmatprep.subr.mxu0 0.0
  %910 = vmatpush1.msra.mxu0 0.0
  %911 = vmatprep.subr.mxu0 0.0
  %912 = vmatpush1.msra.mxu0 0.0
  %913 = vmatprep.subr.mxu0 0.0
  %914 = vmatpush1.msra.mxu0 0.0
  %915 = vmatprep.subr.mxu0 0.0
  %916 = vmatpush1.msra.mxu0 0.0
  %917 = vmatprep.subr.mxu0 0.0
  %918 = vmatpush1.msra.mxu0 0.0
  %919 = vmatprep.mubr.f32.mxu0 0.0
  %920 = vmatmul.mubr.f32.gmra.mrb[0].mxu0 %v851
  %v921 = vpop.f32.mrb[0].mxu0
  %v922 = vadd.f32 0.0, %v921
  %v923 = vpop.f32.mrb[0].mxu0
  %v924 = vadd.f32 0.0, %v923
  %925 = vmatprep.mubr.f32.mxu0 0.0
  %926 = vmatmul.mubr.f32.gmra.mrb[0].mxu0 %v853
  %v927 = vpop.f32.mrb[0].mxu0
  %v928 = vpop.f32.mrb[0].mxu0
  %929 = vdwg.mxu0
  %930 = vmatprep.subr.mxu0 0.0
  %931 = vmatpush1.msra.mxu0 %v181
  %932 = vmatprep.subr.mxu0 0.0
  %933 = vmatpush1.msra.mxu0 %v184
  %934 = vmatprep.subr.mxu0 0.0
  %935 = vmatpush1.msra.mxu0 %v187
  %936 = vmatprep.subr.mxu0 0.0
  %937 = vmatpush1.msra.mxu0 %v190
  %938 = vmatprep.subr.mxu0 0.0
  %939 = vmatpush1.msra.mxu0 0.0
  %940 = vmatprep.subr.mxu0 0.0
  %941 = vmatpush1.msra.mxu0 0.0
  %942 = vmatprep.subr.mxu0 0.0
  %943 = vmatpush1.msra.mxu0 0.0
  %944 = vmatprep.subr.mxu0 0.0
  %945 = vmatpush1.msra.mxu0 0.0
  %946 = vmatprep.subr.mxu0 0.0
  %947 = vmatpush1.msra.mxu0 0.0
  %948 = vmatprep.subr.mxu0 0.0
  %949 = vmatpush1.msra.mxu0 0.0
  %950 = vmatprep.subr.mxu0 0.0
  %951 = vmatpush1.msra.mxu0 0.0
  %952 = vmatprep.subr.mxu0 0.0
  %953 = vmatpush1.msra.mxu0 0.0
  %954 = vmatprep.subr.mxu0 0.0
  %955 = vmatpush1.msra.mxu0 0.0
  %956 = vmatprep.subr.mxu0 0.0
  %957 = vmatpush1.msra.mxu0 0.0
  %958 = vmatprep.subr.mxu0 0.0
  %959 = vmatpush1.msra.mxu0 0.0
  %960 = vmatprep.subr.mxu0 0.0
  %961 = vmatpush1.msra.mxu0 0.0
  %962 = vmatprep.subr.mxu0 0.0
  %963 = vmatpush1.msra.mxu0 0.0
  %964 = vmatprep.subr.mxu0 0.0
  %965 = vmatpush1.msra.mxu0 0.0
  %966 = vmatprep.subr.mxu0 0.0
  %967 = vmatpush1.msra.mxu0 0.0
  %968 = vmatprep.subr.mxu0 0.0
  %969 = vmatpush1.msra.mxu0 0.0
  %970 = vmatprep.subr.mxu0 0.0
  %971 = vmatpush1.msra.mxu0 0.0
  %972 = vmatprep.subr.mxu0 0.0
  %973 = vmatpush1.msra.mxu0 0.0
  %974 = vmatprep.subr.mxu0 0.0
  %975 = vmatpush1.msra.mxu0 0.0
  %976 = vmatprep.subr.mxu0 0.0
  %977 = vmatpush1.msra.mxu0 0.0
  %978 = vmatprep.subr.mxu0 0.0
  %979 = vmatpush1.msra.mxu0 0.0
  %980 = vmatprep.subr.mxu0 0.0
  %981 = vmatpush1.msra.mxu0 0.0
  %982 = vmatprep.subr.mxu0 0.0
  %983 = vmatpush1.msra.mxu0 0.0
  %984 = vmatprep.subr.mxu0 0.0
  %985 = vmatpush1.msra.mxu0 0.0
  %986 = vmatprep.subr.mxu0 0.0
  %987 = vmatpush1.msra.mxu0 0.0
  %988 = vmatprep.subr.mxu0 0.0
  %989 = vmatpush1.msra.mxu0 0.0
  %990 = vmatprep.subr.mxu0 0.0
  %991 = vmatpush1.msra.mxu0 0.0
  %992 = vmatprep.subr.mxu0 0.0
  %993 = vmatpush1.msra.mxu0 0.0
  %994 = vmatprep.mubr.f32.mxu0 0.0
  %995 = vmatmul.mubr.f32.gmra.mrb[0].mxu0 %v851
  %v996 = vpop.f32.mrb[0].mxu0
  %v997 = vpop.f32.mrb[0].mxu0
  %998 = vmatprep.mubr.f32.mxu0 0.0
  %999 = vmatmul.mubr.f32.gmra.mrb[0].mxu0 %v853
  %v1000 = vpop.f32.mrb[0].mxu0
  %v1001 = vadd.f32 0.0, %v1000
  %v1002 = vpop.f32.mrb[0].mxu0
  %1003 = vdwg.mxu0
  %v1004 = vadd.f32 %v160, %v922
  %v1005 = vadd.f32 %v924, %v379
  %v1006 = vadd.f32 %v1005, %v1001
  %v1007 = vmul.f32 %v1004, 0.5
  %v1008 = vmul.f32 %v1006, 0.5
  %v1009 = vsel %vm30, %v1004, %v1007
  %v1010 = vsel %vm30, %v1006, %v1008
  %v1011 = vtanh.pop %v1009
  %v1012 = vtanh.pop %v1010
  %v1013 = vmul.f32 %v1011, 0.5
  %v1014 = vmul.f32 %v1012, 0.5
  %v1015 = vadd.f32 %v1013, 0.5
  %v1016 = vadd.f32 %v1014, 0.5
  %v1017 = vsel %vm30, %v1011, %v1015
  %v1018 = vsel %vm30, %v1012, %v1016
  %v1019 = vmul.f32 %v1017, %v831
  %v1020 = vmul.f32 %v1018, %v832
  %1023 = vrot.lane.b32.xlu0 %v1017, 64
  %v1024 = vpop.permute.xlu0 %1023
  %1025 = vrot.lane.b32.xlu0 %v1018, 64
  %v1026 = vpop.permute.xlu0 %1025
  %v1029 = vmul.f32 %v1017, %v1024
  %v1030 = vmul.f32 %v1018, %v1026
  %1033 = vrot.lane.b32.xlu0 %v1029, 32
  %v1034 = vpop.permute.xlu0 %1033
  %1035 = vrot.lane.b32.xlu0 %v1030, 32
  %v1036 = vpop.permute.xlu0 %1035
  %v1039 = vadd.f32 %v1019, %v1034
  %v1040 = vadd.f32 %v1020, %v1036
  %v1041 = vtanh.pop %v1039
  %v1042 = vtanh.pop %v1040
  %1045 = vrot.lane.b32.xlu0 %v1041, 64
  %v1046 = vpop.permute.xlu0 %1045
  %1047 = vrot.lane.b32.xlu0 %v1042, 64
  %v1048 = vpop.permute.xlu0 %1047
  %v1051 = vmul.f32 %v1017, %v1046
  %v1052 = vmul.f32 %v1018, %v1048
  %1055 = vrot.lane.b32.xlu0 %v1051, 32
  %v1056 = vpop.permute.xlu0 %1055
  %1057 = vrot.lane.b32.xlu0 %v1052, 32
  %v1058 = vpop.permute.xlu0 %1057
  %v1059 = vsel %vm220, %v1056, 0
  %v1061 = vsel %vm220, %v1058, 0
  %1063 = vmatprep.subr.mxu0 %v180
  %1064 = vmatpush1.msra.mxu0 %v179
  %1065 = vmatprep.subr.mxu0 %v183
  %1066 = vmatpush1.msra.mxu0 %v182
  %1067 = vmatprep.subr.mxu0 %v186
  %1068 = vmatpush1.msra.mxu0 %v185
  %1069 = vmatprep.subr.mxu0 %v189
  %1070 = vmatpush1.msra.mxu0 %v188
  %1071 = vmatprep.subr.mxu0 0.0
  %1072 = vmatpush1.msra.mxu0 0.0
  %1073 = vmatprep.subr.mxu0 0.0
  %1074 = vmatpush1.msra.mxu0 0.0
  %1075 = vmatprep.subr.mxu0 0.0
  %1076 = vmatpush1.msra.mxu0 0.0
  %1077 = vmatprep.subr.mxu0 0.0
  %1078 = vmatpush1.msra.mxu0 0.0
  %1079 = vmatprep.subr.mxu0 0.0
  %1080 = vmatpush1.msra.mxu0 0.0
  %1081 = vmatprep.subr.mxu0 0.0
  %1082 = vmatpush1.msra.mxu0 0.0
  %1083 = vmatprep.subr.mxu0 0.0
  %1084 = vmatpush1.msra.mxu0 0.0
  %1085 = vmatprep.subr.mxu0 0.0
  %1086 = vmatpush1.msra.mxu0 0.0
  %1087 = vmatprep.subr.mxu0 0.0
  %1088 = vmatpush1.msra.mxu0 0.0
  %1089 = vmatprep.subr.mxu0 0.0
  %1090 = vmatpush1.msra.mxu0 0.0
  %1091 = vmatprep.subr.mxu0 0.0
  %1092 = vmatpush1.msra.mxu0 0.0
  %1093 = vmatprep.subr.mxu0 0.0
  %1094 = vmatpush1.msra.mxu0 0.0
  %1095 = vmatprep.subr.mxu0 0.0
  %1096 = vmatpush1.msra.mxu0 0.0
  %1097 = vmatprep.subr.mxu0 0.0
  %1098 = vmatpush1.msra.mxu0 0.0
  %1099 = vmatprep.subr.mxu0 0.0
  %1100 = vmatpush1.msra.mxu0 0.0
  %1101 = vmatprep.subr.mxu0 0.0
  %1102 = vmatpush1.msra.mxu0 0.0
  %1103 = vmatprep.subr.mxu0 0.0
  %1104 = vmatpush1.msra.mxu0 0.0
  %1105 = vmatprep.subr.mxu0 0.0
  %1106 = vmatpush1.msra.mxu0 0.0
  %1107 = vmatprep.subr.mxu0 0.0
  %1108 = vmatpush1.msra.mxu0 0.0
  %1109 = vmatprep.subr.mxu0 0.0
  %1110 = vmatpush1.msra.mxu0 0.0
  %1111 = vmatprep.subr.mxu0 0.0
  %1112 = vmatpush1.msra.mxu0 0.0
  %1113 = vmatprep.subr.mxu0 0.0
  %1114 = vmatpush1.msra.mxu0 0.0
  %1115 = vmatprep.subr.mxu0 0.0
  %1116 = vmatpush1.msra.mxu0 0.0
  %1117 = vmatprep.subr.mxu0 0.0
  %1118 = vmatpush1.msra.mxu0 0.0
  %1119 = vmatprep.subr.mxu0 0.0
  %1120 = vmatpush1.msra.mxu0 0.0
  %1121 = vmatprep.subr.mxu0 0.0
  %1122 = vmatpush1.msra.mxu0 0.0
  %1123 = vmatprep.subr.mxu0 0.0
  %1124 = vmatpush1.msra.mxu0 0.0
  %1125 = vmatprep.subr.mxu0 0.0
  %1126 = vmatpush1.msra.mxu0 0.0
  %1127 = vmatprep.mubr.f32.mxu0 0.0
  %1128 = vmatmul.mubr.f32.gmra.mrb[0].mxu0 %v1059
  %v1129 = vpop.f32.mrb[0].mxu0
  %v1130 = vadd.f32 0.0, %v1129
  %v1131 = vpop.f32.mrb[0].mxu0
  %v1132 = vadd.f32 0.0, %v1131
  %1133 = vmatprep.mubr.f32.mxu0 0.0
  %1134 = vmatmul.mubr.f32.gmra.mrb[0].mxu0 %v1061
  %v1135 = vpop.f32.mrb[0].mxu0
  %v1136 = vpop.f32.mrb[0].mxu0
  %1137 = vdwg.mxu0
  %1138 = vmatprep.subr.mxu0 0.0
  %1139 = vmatpush1.msra.mxu0 %v181
  %1140 = vmatprep.subr.mxu0 0.0
  %1141 = vmatpush1.msra.mxu0 %v184
  %1142 = vmatprep.subr.mxu0 0.0
  %1143 = vmatpush1.msra.mxu0 %v187
  %1144 = vmatprep.subr.mxu0 0.0
  %1145 = vmatpush1.msra.mxu0 %v190
  %1146 = vmatprep.subr.mxu0 0.0
  %1147 = vmatpush1.msra.mxu0 0.0
  %1148 = vmatprep.subr.mxu0 0.0
  %1149 = vmatpush1.msra.mxu0 0.0
  %1150 = vmatprep.subr.mxu0 0.0
  %1151 = vmatpush1.msra.mxu0 0.0
  %1152 = vmatprep.subr.mxu0 0.0
  %1153 = vmatpush1.msra.mxu0 0.0
  %1154 = vmatprep.subr.mxu0 0.0
  %1155 = vmatpush1.msra.mxu0 0.0
  %1156 = vmatprep.subr.mxu0 0.0
  %1157 = vmatpush1.msra.mxu0 0.0
  %1158 = vmatprep.subr.mxu0 0.0
  %1159 = vmatpush1.msra.mxu0 0.0
  %1160 = vmatprep.subr.mxu0 0.0
  %1161 = vmatpush1.msra.mxu0 0.0
  %1162 = vmatprep.subr.mxu0 0.0
  %1163 = vmatpush1.msra.mxu0 0.0
  %1164 = vmatprep.subr.mxu0 0.0
  %1165 = vmatpush1.msra.mxu0 0.0
  %1166 = vmatprep.subr.mxu0 0.0
  %1167 = vmatpush1.msra.mxu0 0.0
  %1168 = vmatprep.subr.mxu0 0.0
  %1169 = vmatpush1.msra.mxu0 0.0
  %1170 = vmatprep.subr.mxu0 0.0
  %1171 = vmatpush1.msra.mxu0 0.0
  %1172 = vmatprep.subr.mxu0 0.0
  %1173 = vmatpush1.msra.mxu0 0.0
  %1174 = vmatprep.subr.mxu0 0.0
  %1175 = vmatpush1.msra.mxu0 0.0
  %1176 = vmatprep.subr.mxu0 0.0
  %1177 = vmatpush1.msra.mxu0 0.0
  %1178 = vmatprep.subr.mxu0 0.0
  %1179 = vmatpush1.msra.mxu0 0.0
  %1180 = vmatprep.subr.mxu0 0.0
  %1181 = vmatpush1.msra.mxu0 0.0
  %1182 = vmatprep.subr.mxu0 0.0
  %1183 = vmatpush1.msra.mxu0 0.0
  %1184 = vmatprep.subr.mxu0 0.0
  %1185 = vmatpush1.msra.mxu0 0.0
  %1186 = vmatprep.subr.mxu0 0.0
  %1187 = vmatpush1.msra.mxu0 0.0
  %1188 = vmatprep.subr.mxu0 0.0
  %1189 = vmatpush1.msra.mxu0 0.0
  %1190 = vmatprep.subr.mxu0 0.0
  %1191 = vmatpush1.msra.mxu0 0.0
  %1192 = vmatprep.subr.mxu0 0.0
  %1193 = vmatpush1.msra.mxu0 0.0
  %1194 = vmatprep.subr.mxu0 0.0
  %1195 = vmatpush1.msra.mxu0 0.0
  %1196 = vmatprep.subr.mxu0 0.0
  %1197 = vmatpush1.msra.mxu0 0.0
  %1198 = vmatprep.subr.mxu0 0.0
  %1199 = vmatpush1.msra.mxu0 0.0
  %1200 = vmatprep.subr.mxu0 0.0
  %1201 = vmatpush1.msra.mxu0 0.0
  %1202 = vmatprep.mubr.f32.mxu0 0.0
  %1203 = vmatmul.mubr.f32.gmra.mrb[0].mxu0 %v1059
  %v1204 = vpop.f32.mrb[0].mxu0
  %v1205 = vpop.f32.mrb[0].mxu0
  %1206 = vmatprep.mubr.f32.mxu0 0.0
  %1207 = vmatmul.mubr.f32.gmra.mrb[0].mxu0 %v1061
  %v1208 = vpop.f32.mrb[0].mxu0
  %v1209 = vadd.f32 0.0, %v1208
  %v1210 = vpop.f32.mrb[0].mxu0
  %1211 = vdwg.mxu0
  %v1212 = vadd.f32 %v165, %v1130
  %v1213 = vadd.f32 %v1132, %v379
  %v1214 = vadd.f32 %v1213, %v1209
  %v1215 = vmul.f32 %v1212, 0.5
  %v1216 = vmul.f32 %v1214, 0.5
  %v1217 = vsel %vm30, %v1212, %v1215
  %v1218 = vsel %vm30, %v1214, %v1216
  %v1219 = vtanh.pop %v1217
  %v1220 = vtanh.pop %v1218
  %v1221 = vmul.f32 %v1219, 0.5
  %v1222 = vmul.f32 %v1220, 0.5
  %v1223 = vadd.f32 %v1221, 0.5
  %v1224 = vadd.f32 %v1222, 0.5
  %v1225 = vsel %vm30, %v1219, %v1223
  %v1226 = vsel %vm30, %v1220, %v1224
  %v1227 = vmul.f32 %v1225, %v1039
  %v1228 = vmul.f32 %v1226, %v1040
  %1231 = vrot.lane.b32.xlu0 %v1225, 64
  %v1232 = vpop.permute.xlu0 %1231
  %1233 = vrot.lane.b32.xlu0 %v1226, 64
  %v1234 = vpop.permute.xlu0 %1233
  %v1237 = vmul.f32 %v1225, %v1232
  %v1238 = vmul.f32 %v1226, %v1234
  %1241 = vrot.lane.b32.xlu0 %v1237, 32
  %v1242 = vpop.permute.xlu0 %1241
  %1243 = vrot.lane.b32.xlu0 %v1238, 32
  %v1244 = vpop.permute.xlu0 %1243
  %v1247 = vadd.f32 %v1227, %v1242
  %v1248 = vadd.f32 %v1228, %v1244
  %v1249 = vtanh.pop %v1247
  %v1250 = vtanh.pop %v1248
  %1253 = vrot.lane.b32.xlu0 %v1249, 64
  %v1254 = vpop.permute.xlu0 %1253
  %1255 = vrot.lane.b32.xlu0 %v1250, 64
  %v1256 = vpop.permute.xlu0 %1255
  %v1259 = vmul.f32 %v1225, %v1254
  %v1260 = vmul.f32 %v1226, %v1256
  %1263 = vrot.lane.b32.xlu0 %v1259, 32
  %v1264 = vpop.permute.xlu0 %1263
  %1265 = vrot.lane.b32.xlu0 %v1260, 32
  %v1266 = vpop.permute.xlu0 %1265
  %v1267 = vsel %vm220, %v1264, 0
  %v1269 = vsel %vm220, %v1266, 0
  %1271 = vmatprep.subr.mxu0 %v180
  %1272 = vmatpush1.msra.mxu0 %v179
  %1273 = vmatprep.subr.mxu0 %v183
  %1274 = vmatpush1.msra.mxu0 %v182
  %1275 = vmatprep.subr.mxu0 %v186
  %1276 = vmatpush1.msra.mxu0 %v185
  %1277 = vmatprep.subr.mxu0 %v189
  %1278 = vmatpush1.msra.mxu0 %v188
  %1279 = vmatprep.subr.mxu0 0.0
  %1280 = vmatpush1.msra.mxu0 0.0
  %1281 = vmatprep.subr.mxu0 0.0
  %1282 = vmatpush1.msra.mxu0 0.0
  %1283 = vmatprep.subr.mxu0 0.0
  %1284 = vmatpush1.msra.mxu0 0.0
  %1285 = vmatprep.subr.mxu0 0.0
  %1286 = vmatpush1.msra.mxu0 0.0
  %1287 = vmatprep.subr.mxu0 0.0
  %1288 = vmatpush1.msra.mxu0 0.0
  %1289 = vmatprep.subr.mxu0 0.0
  %1290 = vmatpush1.msra.mxu0 0.0
  %1291 = vmatprep.subr.mxu0 0.0
  %1292 = vmatpush1.msra.mxu0 0.0
  %1293 = vmatprep.subr.mxu0 0.0
  %1294 = vmatpush1.msra.mxu0 0.0
  %1295 = vmatprep.subr.mxu0 0.0
  %1296 = vmatpush1.msra.mxu0 0.0
  %1297 = vmatprep.subr.mxu0 0.0
  %1298 = vmatpush1.msra.mxu0 0.0
  %1299 = vmatprep.subr.mxu0 0.0
  %1300 = vmatpush1.msra.mxu0 0.0
  %1301 = vmatprep.subr.mxu0 0.0
  %1302 = vmatpush1.msra.mxu0 0.0
  %1303 = vmatprep.subr.mxu0 0.0
  %1304 = vmatpush1.msra.mxu0 0.0
  %1305 = vmatprep.subr.mxu0 0.0
  %1306 = vmatpush1.msra.mxu0 0.0
  %1307 = vmatprep.subr.mxu0 0.0
  %1308 = vmatpush1.msra.mxu0 0.0
  %1309 = vmatprep.subr.mxu0 0.0
  %1310 = vmatpush1.msra.mxu0 0.0
  %1311 = vmatprep.subr.mxu0 0.0
  %1312 = vmatpush1.msra.mxu0 0.0
  %1313 = vmatprep.subr.mxu0 0.0
  %1314 = vmatpush1.msra.mxu0 0.0
  %1315 = vmatprep.subr.mxu0 0.0
  %1316 = vmatpush1.msra.mxu0 0.0
  %1317 = vmatprep.subr.mxu0 0.0
  %1318 = vmatpush1.msra.mxu0 0.0
  %1319 = vmatprep.subr.mxu0 0.0
  %1320 = vmatpush1.msra.mxu0 0.0
  %1321 = vmatprep.subr.mxu0 0.0
  %1322 = vmatpush1.msra.mxu0 0.0
  %1323 = vmatprep.subr.mxu0 0.0
  %1324 = vmatpush1.msra.mxu0 0.0
  %1325 = vmatprep.subr.mxu0 0.0
  %1326 = vmatpush1.msra.mxu0 0.0
  %1327 = vmatprep.subr.mxu0 0.0
  %1328 = vmatpush1.msra.mxu0 0.0
  %1329 = vmatprep.subr.mxu0 0.0
  %1330 = vmatpush1.msra.mxu0 0.0
  %1331 = vmatprep.subr.mxu0 0.0
  %1332 = vmatpush1.msra.mxu0 0.0
  %1333 = vmatprep.subr.mxu0 0.0
  %1334 = vmatpush1.msra.mxu0 0.0
  %1335 = vmatprep.mubr.f32.mxu0 0.0
  %1336 = vmatmul.mubr.f32.gmra.mrb[0].mxu0 %v1267
  %v1337 = vpop.f32.mrb[0].mxu0
  %v1338 = vadd.f32 0.0, %v1337
  %v1339 = vpop.f32.mrb[0].mxu0
  %v1340 = vadd.f32 0.0, %v1339
  %1341 = vmatprep.mubr.f32.mxu0 0.0
  %1342 = vmatmul.mubr.f32.gmra.mrb[0].mxu0 %v1269
  %v1343 = vpop.f32.mrb[0].mxu0
  %v1344 = vpop.f32.mrb[0].mxu0
  %1345 = vdwg.mxu0
  %1346 = vmatprep.subr.mxu0 0.0
  %1347 = vmatpush1.msra.mxu0 %v181
  %1348 = vmatprep.subr.mxu0 0.0
  %1349 = vmatpush1.msra.mxu0 %v184
  %1350 = vmatprep.subr.mxu0 0.0
  %1351 = vmatpush1.msra.mxu0 %v187
  %1352 = vmatprep.subr.mxu0 0.0
  %1353 = vmatpush1.msra.mxu0 %v190
  %1354 = vmatprep.subr.mxu0 0.0
  %1355 = vmatpush1.msra.mxu0 0.0
  %1356 = vmatprep.subr.mxu0 0.0
  %1357 = vmatpush1.msra.mxu0 0.0
  %1358 = vmatprep.subr.mxu0 0.0
  %1359 = vmatpush1.msra.mxu0 0.0
  %1360 = vmatprep.subr.mxu0 0.0
  %1361 = vmatpush1.msra.mxu0 0.0
  %1362 = vmatprep.subr.mxu0 0.0
  %1363 = vmatpush1.msra.mxu0 0.0
  %1364 = vmatprep.subr.mxu0 0.0
  %1365 = vmatpush1.msra.mxu0 0.0
  %1366 = vmatprep.subr.mxu0 0.0
  %1367 = vmatpush1.msra.mxu0 0.0
  %1368 = vmatprep.subr.mxu0 0.0
  %1369 = vmatpush1.msra.mxu0 0.0
  %1370 = vmatprep.subr.mxu0 0.0
  %1371 = vmatpush1.msra.mxu0 0.0
  %1372 = vmatprep.subr.mxu0 0.0
  %1373 = vmatpush1.msra.mxu0 0.0
  %1374 = vmatprep.subr.mxu0 0.0
  %1375 = vmatpush1.msra.mxu0 0.0
  %1376 = vmatprep.subr.mxu0 0.0
  %1377 = vmatpush1.msra.mxu0 0.0
  %1378 = vmatprep.subr.mxu0 0.0
  %1379 = vmatpush1.msra.mxu0 0.0
  %1380 = vmatprep.subr.mxu0 0.0
  %1381 = vmatpush1.msra.mxu0 0.0
  %1382 = vmatprep.subr.mxu0 0.0
  %1383 = vmatpush1.msra.mxu0 0.0
  %1384 = vmatprep.subr.mxu0 0.0
  %1385 = vmatpush1.msra.mxu0 0.0
  %1386 = vmatprep.subr.mxu0 0.0
  %1387 = vmatpush1.msra.mxu0 0.0
  %1388 = vmatprep.subr.mxu0 0.0
  %1389 = vmatpush1.msra.mxu0 0.0
  %1390 = vmatprep.subr.mxu0 0.0
  %1391 = vmatpush1.msra.mxu0 0.0
  %1392 = vmatprep.subr.mxu0 0.0
  %1393 = vmatpush1.msra.mxu0 0.0
  %1394 = vmatprep.subr.mxu0 0.0
  %1395 = vmatpush1.msra.mxu0 0.0
  %1396 = vmatprep.subr.mxu0 0.0
  %1397 = vmatpush1.msra.mxu0 0.0
  %1398 = vmatprep.subr.mxu0 0.0
  %1399 = vmatpush1.msra.mxu0 0.0
  %1400 = vmatprep.subr.mxu0 0.0
  %1401 = vmatpush1.msra.mxu0 0.0
  %1402 = vmatprep.subr.mxu0 0.0
  %1403 = vmatpush1.msra.mxu0 0.0
  %1404 = vmatprep.subr.mxu0 0.0
  %1405 = vmatpush1.msra.mxu0 0.0
  %1406 = vmatprep.subr.mxu0 0.0
  %1407 = vmatpush1.msra.mxu0 0.0
  %1408 = vmatprep.subr.mxu0 0.0
  %1409 = vmatpush1.msra.mxu0 0.0
  %1410 = vmatprep.mubr.f32.mxu0 0.0
  %1411 = vmatmul.mubr.f32.gmra.mrb[0].mxu0 %v1267
  %v1412 = vpop.f32.mrb[0].mxu0
  %v1413 = vpop.f32.mrb[0].mxu0
  %1414 = vmatprep.mubr.f32.mxu0 0.0
  %1415 = vmatmul.mubr.f32.gmra.mrb[0].mxu0 %v1269
  %v1416 = vpop.f32.mrb[0].mxu0
  %v1417 = vadd.f32 0.0, %v1416
  %v1418 = vpop.f32.mrb[0].mxu0
  %1419 = vdwg.mxu0
  %v1420 = vadd.f32 %v170, %v1338
  %v1421 = vadd.f32 %v1340, %v379
  %v1422 = vadd.f32 %v1421, %v1417
  %v1423 = vmul.f32 %v1420, 0.5
  %v1424 = vmul.f32 %v1422, 0.5
  %v1425 = vsel %vm30, %v1420, %v1423
  %v1426 = vsel %vm30, %v1422, %v1424
  %v1427 = vtanh.pop %v1425
  %v1428 = vtanh.pop %v1426
  %v1429 = vmul.f32 %v1427, 0.5
  %v1430 = vmul.f32 %v1428, 0.5
  %v1431 = vadd.f32 %v1429, 0.5
  %v1432 = vadd.f32 %v1430, 0.5
  %v1433 = vsel %vm30, %v1427, %v1431
  %v1434 = vsel %vm30, %v1428, %v1432
  %v1435 = vmul.f32 %v1433, %v1247
  %v1436 = vmul.f32 %v1434, %v1248
  %1439 = vrot.lane.b32.xlu0 %v1433, 64
  %v1440 = vpop.permute.xlu0 %1439
  %1441 = vrot.lane.b32.xlu0 %v1434, 64
  %v1442 = vpop.permute.xlu0 %1441
  %v1445 = vmul.f32 %v1433, %v1440
  %v1446 = vmul.f32 %v1434, %v1442
  %1449 = vrot.lane.b32.xlu0 %v1445, 32
  %v1450 = vpop.permute.xlu0 %1449
  %1451 = vrot.lane.b32.xlu0 %v1446, 32
  %v1452 = vpop.permute.xlu0 %1451
  %v1455 = vadd.f32 %v1435, %v1450
  %v1456 = vadd.f32 %v1436, %v1452
  %v1457 = vtanh.pop %v1455
  %v1458 = vtanh.pop %v1456
  %1461 = vrot.lane.b32.xlu0 %v1457, 64
  %v1462 = vpop.permute.xlu0 %1461
  %1463 = vrot.lane.b32.xlu0 %v1458, 64
  %v1464 = vpop.permute.xlu0 %1463
  %v1467 = vmul.f32 %v1433, %v1462
  %v1468 = vmul.f32 %v1434, %v1464
  %1471 = vrot.lane.b32.xlu0 %v1467, 32
  %v1472 = vpop.permute.xlu0 %1471
  %1473 = vrot.lane.b32.xlu0 %v1468, 32
  %v1474 = vpop.permute.xlu0 %1473
  %v1475 = vsel %vm220, %v1472, 0
  %v1477 = vsel %vm220, %v1474, 0
  %1479 = vmatprep.subr.mxu0 %v180
  %1480 = vmatpush1.msra.mxu0 %v179
  %1481 = vmatprep.subr.mxu0 %v183
  %1482 = vmatpush1.msra.mxu0 %v182
  %1483 = vmatprep.subr.mxu0 %v186
  %1484 = vmatpush1.msra.mxu0 %v185
  %1485 = vmatprep.subr.mxu0 %v189
  %1486 = vmatpush1.msra.mxu0 %v188
  %1487 = vmatprep.subr.mxu0 0.0
  %1488 = vmatpush1.msra.mxu0 0.0
  %1489 = vmatprep.subr.mxu0 0.0
  %1490 = vmatpush1.msra.mxu0 0.0
  %1491 = vmatprep.subr.mxu0 0.0
  %1492 = vmatpush1.msra.mxu0 0.0
  %1493 = vmatprep.subr.mxu0 0.0
  %1494 = vmatpush1.msra.mxu0 0.0
  %1495 = vmatprep.subr.mxu0 0.0
  %1496 = vmatpush1.msra.mxu0 0.0
  %1497 = vmatprep.subr.mxu0 0.0
  %1498 = vmatpush1.msra.mxu0 0.0
  %1499 = vmatprep.subr.mxu0 0.0
  %1500 = vmatpush1.msra.mxu0 0.0
  %1501 = vmatprep.subr.mxu0 0.0
  %1502 = vmatpush1.msra.mxu0 0.0
  %1503 = vmatprep.subr.mxu0 0.0
  %1504 = vmatpush1.msra.mxu0 0.0
  %1505 = vmatprep.subr.mxu0 0.0
  %1506 = vmatpush1.msra.mxu0 0.0
  %1507 = vmatprep.subr.mxu0 0.0
  %1508 = vmatpush1.msra.mxu0 0.0
  %1509 = vmatprep.subr.mxu0 0.0
  %1510 = vmatpush1.msra.mxu0 0.0
  %1511 = vmatprep.subr.mxu0 0.0
  %1512 = vmatpush1.msra.mxu0 0.0
  %1513 = vmatprep.subr.mxu0 0.0
  %1514 = vmatpush1.msra.mxu0 0.0
  %1515 = vmatprep.subr.mxu0 0.0
  %1516 = vmatpush1.msra.mxu0 0.0
  %1517 = vmatprep.subr.mxu0 0.0
  %1518 = vmatpush1.msra.mxu0 0.0
  %1519 = vmatprep.subr.mxu0 0.0
  %1520 = vmatpush1.msra.mxu0 0.0
  %1521 = vmatprep.subr.mxu0 0.0
  %1522 = vmatpush1.msra.mxu0 0.0
  %1523 = vmatprep.subr.mxu0 0.0
  %1524 = vmatpush1.msra.mxu0 0.0
  %1525 = vmatprep.subr.mxu0 0.0
  %1526 = vmatpush1.msra.mxu0 0.0
  %1527 = vmatprep.subr.mxu0 0.0
  %1528 = vmatpush1.msra.mxu0 0.0
  %1529 = vmatprep.subr.mxu0 0.0
  %1530 = vmatpush1.msra.mxu0 0.0
  %1531 = vmatprep.subr.mxu0 0.0
  %1532 = vmatpush1.msra.mxu0 0.0
  %1533 = vmatprep.subr.mxu0 0.0
  %1534 = vmatpush1.msra.mxu0 0.0
  %1535 = vmatprep.subr.mxu0 0.0
  %1536 = vmatpush1.msra.mxu0 0.0
  %1537 = vmatprep.subr.mxu0 0.0
  %1538 = vmatpush1.msra.mxu0 0.0
  %1539 = vmatprep.subr.mxu0 0.0
  %1540 = vmatpush1.msra.mxu0 0.0
  %1541 = vmatprep.subr.mxu0 0.0
  %1542 = vmatpush1.msra.mxu0 0.0
  %1543 = vmatprep.mubr.f32.mxu0 0.0
  %1544 = vmatmul.mubr.f32.gmra.mrb[0].mxu0 %v1475
  %v1545 = vpop.f32.mrb[0].mxu0
  %v1546 = vadd.f32 0.0, %v1545
  %v1547 = vpop.f32.mrb[0].mxu0
  %v1548 = vadd.f32 0.0, %v1547
  %1549 = vmatprep.mubr.f32.mxu0 0.0
  %1550 = vmatmul.mubr.f32.gmra.mrb[0].mxu0 %v1477
  %v1551 = vpop.f32.mrb[0].mxu0
  %v1552 = vpop.f32.mrb[0].mxu0
  %1553 = vdwg.mxu0
  %1554 = vmatprep.subr.mxu0 0.0
  %1555 = vmatpush1.msra.mxu0 %v181
  %1556 = vmatprep.subr.mxu0 0.0
  %1557 = vmatpush1.msra.mxu0 %v184
  %1558 = vmatprep.subr.mxu0 0.0
  %1559 = vmatpush1.msra.mxu0 %v187
  %1560 = vmatprep.subr.mxu0 0.0
  %1561 = vmatpush1.msra.mxu0 %v190
  %1562 = vmatprep.subr.mxu0 0.0
  %1563 = vmatpush1.msra.mxu0 0.0
  %1564 = vmatprep.subr.mxu0 0.0
  %1565 = vmatpush1.msra.mxu0 0.0
  %1566 = vmatprep.subr.mxu0 0.0
  %1567 = vmatpush1.msra.mxu0 0.0
  %1568 = vmatprep.subr.mxu0 0.0
  %1569 = vmatpush1.msra.mxu0 0.0
  %1570 = vmatprep.subr.mxu0 0.0
  %1571 = vmatpush1.msra.mxu0 0.0
  %1572 = vmatprep.subr.mxu0 0.0
  %1573 = vmatpush1.msra.mxu0 0.0
  %1574 = vmatprep.subr.mxu0 0.0
  %1575 = vmatpush1.msra.mxu0 0.0
  %1576 = vmatprep.subr.mxu0 0.0
  %1577 = vmatpush1.msra.mxu0 0.0
  %1578 = vmatprep.subr.mxu0 0.0
  %1579 = vmatpush1.msra.mxu0 0.0
  %1580 = vmatprep.subr.mxu0 0.0
  %1581 = vmatpush1.msra.mxu0 0.0
  %1582 = vmatprep.subr.mxu0 0.0
  %1583 = vmatpush1.msra.mxu0 0.0
  %1584 = vmatprep.subr.mxu0 0.0
  %1585 = vmatpush1.msra.mxu0 0.0
  %1586 = vmatprep.subr.mxu0 0.0
  %1587 = vmatpush1.msra.mxu0 0.0
  %1588 = vmatprep.subr.mxu0 0.0
  %1589 = vmatpush1.msra.mxu0 0.0
  %1590 = vmatprep.subr.mxu0 0.0
  %1591 = vmatpush1.msra.mxu0 0.0
  %1592 = vmatprep.subr.mxu0 0.0
  %1593 = vmatpush1.msra.mxu0 0.0
  %1594 = vmatprep.subr.mxu0 0.0
  %1595 = vmatpush1.msra.mxu0 0.0
  %1596 = vmatprep.subr.mxu0 0.0
  %1597 = vmatpush1.msra.mxu0 0.0
  %1598 = vmatprep.subr.mxu0 0.0
  %1599 = vmatpush1.msra.mxu0 0.0
  %1600 = vmatprep.subr.mxu0 0.0
  %1601 = vmatpush1.msra.mxu0 0.0
  %1602 = vmatprep.subr.mxu0 0.0
  %1603 = vmatpush1.msra.mxu0 0.0
  %1604 = vmatprep.subr.mxu0 0.0
  %1605 = vmatpush1.msra.mxu0 0.0
  %1606 = vmatprep.subr.mxu0 0.0
  %1607 = vmatpush1.msra.mxu0 0.0
  %1608 = vmatprep.subr.mxu0 0.0
  %1609 = vmatpush1.msra.mxu0 0.0
  %1610 = vmatprep.subr.mxu0 0.0
  %1611 = vmatpush1.msra.mxu0 0.0
  %1612 = vmatprep.subr.mxu0 0.0
  %1613 = vmatpush1.msra.mxu0 0.0
  %1614 = vmatprep.subr.mxu0 0.0
  %1615 = vmatpush1.msra.mxu0 0.0
  %1616 = vmatprep.subr.mxu0 0.0
  %1617 = vmatpush1.msra.mxu0 0.0
  %1618 = vmatprep.mubr.f32.mxu0 0.0
  %1619 = vmatmul.mubr.f32.gmra.mrb[0].mxu0 %v1475
  %v1620 = vpop.f32.mrb[0].mxu0
  %v1621 = vpop.f32.mrb[0].mxu0
  %1622 = vmatprep.mubr.f32.mxu0 0.0
  %1623 = vmatmul.mubr.f32.gmra.mrb[0].mxu0 %v1477
  %v1624 = vpop.f32.mrb[0].mxu0
  %v1625 = vadd.f32 0.0, %v1624
  %v1626 = vpop.f32.mrb[0].mxu0
  %1627 = vdwg.mxu0
  %v1628 = vadd.f32 %v175, %v1546
  %v1629 = vadd.f32 %v1548, %v379
  %v1630 = vadd.f32 %v1629, %v1625
  %v1631 = vmul.f32 %v1628, 0.5
  %v1632 = vmul.f32 %v1630, 0.5
  %v1633 = vsel %vm30, %v1628, %v1631
  %v1634 = vsel %vm30, %v1630, %v1632
  %v1635 = vtanh.pop %v1633
  %v1636 = vtanh.pop %v1634
  %v1637 = vmul.f32 %v1635, 0.5
  %v1638 = vmul.f32 %v1636, 0.5
  %v1639 = vadd.f32 %v1637, 0.5
  %v1640 = vadd.f32 %v1638, 0.5
  %v1641 = vsel %vm30, %v1635, %v1639
  %v1642 = vsel %vm30, %v1636, %v1640
  %v1643 = vmul.f32 %v1641, %v1455
  %v1644 = vmul.f32 %v1642, %v1456
  %1647 = vrot.lane.b32.xlu0 %v1641, 64
  %v1648 = vpop.permute.xlu0 %1647
  %1649 = vrot.lane.b32.xlu0 %v1642, 64
  %v1650 = vpop.permute.xlu0 %1649
  %v1653 = vmul.f32 %v1641, %v1648
  %v1654 = vmul.f32 %v1642, %v1650
  %1657 = vrot.lane.b32.xlu0 %v1653, 32
  %v1658 = vpop.permute.xlu0 %1657
  %1659 = vrot.lane.b32.xlu0 %v1654, 32
  %v1660 = vpop.permute.xlu0 %1659
  %v1663 = vadd.f32 %v1643, %v1658
  %v1664 = vadd.f32 %v1644, %v1660
  %v1665 = vtanh.pop %v1663
  %v1666 = vtanh.pop %v1664
  %1669 = vrot.lane.b32.xlu0 %v1665, 64
  %v1670 = vpop.permute.xlu0 %1669
  %1671 = vrot.lane.b32.xlu0 %v1666, 64
  %v1672 = vpop.permute.xlu0 %1671
  %v1675 = vmul.f32 %v1641, %v1670
  %v1676 = vmul.f32 %v1642, %v1672
  %1679 = vrot.lane.b32.xlu0 %v1675, 32
  %v1680 = vpop.permute.xlu0 %1679
  %1681 = vrot.lane.b32.xlu0 %v1676, 32
  %v1682 = vpop.permute.xlu0 %1681
  %v1683 = vsel %vm220, %v1680, 0
  %v1685 = vsel %vm220, %v1682, 0
  %1687 = vmatprep.subr.mxu0 %v180
  %1688 = vmatpush1.msra.mxu0 %v179
  %1689 = vmatprep.subr.mxu0 %v183
  %1690 = vmatpush1.msra.mxu0 %v182
  %1691 = vmatprep.subr.mxu0 %v186
  %1692 = vmatpush1.msra.mxu0 %v185
  %1693 = vmatprep.subr.mxu0 %v189
  %1694 = vmatpush1.msra.mxu0 %v188
  %1695 = vmatprep.subr.mxu0 0.0
  %1696 = vmatpush1.msra.mxu0 0.0
  %1697 = vmatprep.subr.mxu0 0.0
  %1698 = vmatpush1.msra.mxu0 0.0
  %1699 = vmatprep.subr.mxu0 0.0
  %1700 = vmatpush1.msra.mxu0 0.0
  %1701 = vmatprep.subr.mxu0 0.0
  %1702 = vmatpush1.msra.mxu0 0.0
  %1703 = vmatprep.subr.mxu0 0.0
  %1704 = vmatpush1.msra.mxu0 0.0
  %1705 = vmatprep.subr.mxu0 0.0
  %1706 = vmatpush1.msra.mxu0 0.0
  %1707 = vmatprep.subr.mxu0 0.0
  %1708 = vmatpush1.msra.mxu0 0.0
  %1709 = vmatprep.subr.mxu0 0.0
  %1710 = vmatpush1.msra.mxu0 0.0
  %1711 = vmatprep.subr.mxu0 0.0
  %1712 = vmatpush1.msra.mxu0 0.0
  %1713 = vmatprep.subr.mxu0 0.0
  %1714 = vmatpush1.msra.mxu0 0.0
  %1715 = vmatprep.subr.mxu0 0.0
  %1716 = vmatpush1.msra.mxu0 0.0
  %1717 = vmatprep.subr.mxu0 0.0
  %1718 = vmatpush1.msra.mxu0 0.0
  %1719 = vmatprep.subr.mxu0 0.0
  %1720 = vmatpush1.msra.mxu0 0.0
  %1721 = vmatprep.subr.mxu0 0.0
  %1722 = vmatpush1.msra.mxu0 0.0
  %1723 = vmatprep.subr.mxu0 0.0
  %1724 = vmatpush1.msra.mxu0 0.0
  %1725 = vmatprep.subr.mxu0 0.0
  %1726 = vmatpush1.msra.mxu0 0.0
  %1727 = vmatprep.subr.mxu0 0.0
  %1728 = vmatpush1.msra.mxu0 0.0
  %1729 = vmatprep.subr.mxu0 0.0
  %1730 = vmatpush1.msra.mxu0 0.0
  %1731 = vmatprep.subr.mxu0 0.0
  %1732 = vmatpush1.msra.mxu0 0.0
  %1733 = vmatprep.subr.mxu0 0.0
  %1734 = vmatpush1.msra.mxu0 0.0
  %1735 = vmatprep.subr.mxu0 0.0
  %1736 = vmatpush1.msra.mxu0 0.0
  %1737 = vmatprep.subr.mxu0 0.0
  %1738 = vmatpush1.msra.mxu0 0.0
  %1739 = vmatprep.subr.mxu0 0.0
  %1740 = vmatpush1.msra.mxu0 0.0
  %1741 = vmatprep.subr.mxu0 0.0
  %1742 = vmatpush1.msra.mxu0 0.0
  %1743 = vmatprep.subr.mxu0 0.0
  %1744 = vmatpush1.msra.mxu0 0.0
  %1745 = vmatprep.subr.mxu0 0.0
  %1746 = vmatpush1.msra.mxu0 0.0
  %1747 = vmatprep.subr.mxu0 0.0
  %1748 = vmatpush1.msra.mxu0 0.0
  %1749 = vmatprep.subr.mxu0 0.0
  %1750 = vmatpush1.msra.mxu0 0.0
  %1751 = vmatprep.mubr.f32.mxu0 0.0
  %1752 = vmatmul.mubr.f32.gmra.mrb[0].mxu0 %v1683
  %v1753 = vpop.f32.mrb[0].mxu0
  %v1754 = vpop.f32.mrb[0].mxu0
  %v1755 = vadd.f32 0.0, %v1754
  %1756 = vmatprep.mubr.f32.mxu0 0.0
  %1757 = vmatmul.mubr.f32.gmra.mrb[0].mxu0 %v1685
  %v1758 = vpop.f32.mrb[0].mxu0
  %v1759 = vpop.f32.mrb[0].mxu0
  %1760 = vdwg.mxu0
  %1761 = vmatprep.subr.mxu0 0.0
  %1762 = vmatpush1.msra.mxu0 %v181
  %1763 = vmatprep.subr.mxu0 0.0
  %1764 = vmatpush1.msra.mxu0 %v184
  %1765 = vmatprep.subr.mxu0 0.0
  %1766 = vmatpush1.msra.mxu0 %v187
  %1767 = vmatprep.subr.mxu0 0.0
  %1768 = vmatpush1.msra.mxu0 %v190
  %1769 = vmatprep.subr.mxu0 0.0
  %1770 = vmatpush1.msra.mxu0 0.0
  %1771 = vmatprep.subr.mxu0 0.0
  %1772 = vmatpush1.msra.mxu0 0.0
  %1773 = vmatprep.subr.mxu0 0.0
  %1774 = vmatpush1.msra.mxu0 0.0
  %1775 = vmatprep.subr.mxu0 0.0
  %1776 = vmatpush1.msra.mxu0 0.0
  %1777 = vmatprep.subr.mxu0 0.0
  %1778 = vmatpush1.msra.mxu0 0.0
  %1779 = vmatprep.subr.mxu0 0.0
  %1780 = vmatpush1.msra.mxu0 0.0
  %1781 = vmatprep.subr.mxu0 0.0
  %1782 = vmatpush1.msra.mxu0 0.0
  %1783 = vmatprep.subr.mxu0 0.0
  %1784 = vmatpush1.msra.mxu0 0.0
  %1785 = vmatprep.subr.mxu0 0.0
  %1786 = vmatpush1.msra.mxu0 0.0
  %1787 = vmatprep.subr.mxu0 0.0
  %1788 = vmatpush1.msra.mxu0 0.0
  %1789 = vmatprep.subr.mxu0 0.0
  %1790 = vmatpush1.msra.mxu0 0.0
  %1791 = vmatprep.subr.mxu0 0.0
  %1792 = vmatpush1.msra.mxu0 0.0
  %1793 = vmatprep.subr.mxu0 0.0
  %1794 = vmatpush1.msra.mxu0 0.0
  %1795 = vmatprep.subr.mxu0 0.0
  %1796 = vmatpush1.msra.mxu0 0.0
  %1797 = vmatprep.subr.mxu0 0.0
  %1798 = vmatpush1.msra.mxu0 0.0
  %1799 = vmatprep.subr.mxu0 0.0
  %1800 = vmatpush1.msra.mxu0 0.0
  %1801 = vmatprep.subr.mxu0 0.0
  %1802 = vmatpush1.msra.mxu0 0.0
  %1803 = vmatprep.subr.mxu0 0.0
  %1804 = vmatpush1.msra.mxu0 0.0
  %1805 = vmatprep.subr.mxu0 0.0
  %1806 = vmatpush1.msra.mxu0 0.0
  %1807 = vmatprep.subr.mxu0 0.0
  %1808 = vmatpush1.msra.mxu0 0.0
  %1809 = vmatprep.subr.mxu0 0.0
  %1810 = vmatpush1.msra.mxu0 0.0
  %1811 = vmatprep.subr.mxu0 0.0
  %1812 = vmatpush1.msra.mxu0 0.0
  %1813 = vmatprep.subr.mxu0 0.0
  %1814 = vmatpush1.msra.mxu0 0.0
  %1815 = vmatprep.subr.mxu0 0.0
  %1816 = vmatpush1.msra.mxu0 0.0
  %1817 = vmatprep.subr.mxu0 0.0
  %1818 = vmatpush1.msra.mxu0 0.0
  %1819 = vmatprep.subr.mxu0 0.0
  %1820 = vmatpush1.msra.mxu0 0.0
  %1821 = vmatprep.subr.mxu0 0.0
  %1822 = vmatpush1.msra.mxu0 0.0
  %1823 = vmatprep.subr.mxu0 0.0
  %1824 = vmatpush1.msra.mxu0 0.0
  %1825 = vmatprep.mubr.f32.mxu0 0.0
  %1826 = vmatmul.mubr.f32.gmra.mrb[0].mxu0 %v1683
  %v1827 = vpop.f32.mrb[0].mxu0
  %v1828 = vpop.f32.mrb[0].mxu0
  %1829 = vmatprep.mubr.f32.mxu0 0.0
  %1830 = vmatmul.mubr.f32.gmra.mrb[0].mxu0 %v1685
  %v1831 = vpop.f32.mrb[0].mxu0
  %v1832 = vadd.f32 0.0, %v1831
  %v1833 = vpop.f32.mrb[0].mxu0
  %1834 = vdwg.mxu0
  %v1835 = vadd.f32 %v1755, %v379
  %v1836 = vadd.f32 %v1835, %v1832
  %v1837 = vmul.f32 %v1836, 0.5
  %v1838 = vsel %vm30, %v1836, %v1837
  %v1839 = vtanh.pop %v1838
  %v1840 = vmul.f32 %v1839, 0.5
  %v1841 = vadd.f32 %v1840, 0.5
  %v1842 = vsel %vm30, %v1839, %v1841
  %v1843 = vmul.f32 %v1842, %v1664
  %1845 = vrot.lane.b32.xlu0 %v1842, 64
  %v1846 = vpop.permute.xlu0 %1845
  %v1848 = vmul.f32 %v1842, %v1846
  %1850 = vrot.lane.b32.xlu0 %v1848, 32
  %v1851 = vpop.permute.xlu0 %1850
  %v1853 = vadd.f32 %v1843, %v1851
  %v1854 = vtanh.pop %v1853
  %1856 = vrot.lane.b32.xlu0 %v1854, 64
  %v1857 = vpop.permute.xlu0 %1856
  %v1859 = vmul.f32 %v1842, %v1857
  %v1860 = vld [vmem:[%s5] sm:$0xff]
  %v1861 = vld [vmem:[%s5 + $0x8] sm:$0xff]
  %v1862 = vld [vmem:[%s5 + $0x10] sm:$0xff]
  %v1863 = vld [vmem:[%s5 + $0x18] sm:$0xff]
  %v1864 = vld [vmem:[%s6] sm:$0x1]
  %v1866 = vlaneseq
  %v1867 = vshrl.u32 %v1866, 7
  %v1868 = vsub.s32 0, %v1867
  %v1869 = vrot.slane %v1864, %v1868
  %1872 = vrot.lane.b32.xlu0 %v1859, 32
  %v1873 = vpop.permute.xlu0 %1872
  %v1874 = vsel %vm220, %v1873, 0
  %1876 = vmatprep.subr.mxu0 0.0
  %1877 = vmatpush1.msra.mxu0 %v1860
  %1878 = vmatprep.subr.mxu0 0.0
  %1879 = vmatpush1.msra.mxu0 %v1861
  %1880 = vmatprep.subr.mxu0 0.0
  %1881 = vmatpush1.msra.mxu0 %v1862
  %1882 = vmatprep.subr.mxu0 0.0
  %1883 = vmatpush1.msra.mxu0 %v1863
  %1884 = vmatprep.subr.mxu0 0.0
  %1885 = vmatpush1.msra.mxu0 0.0
  %1886 = vmatprep.subr.mxu0 0.0
  %1887 = vmatpush1.msra.mxu0 0.0
  %1888 = vmatprep.subr.mxu0 0.0
  %1889 = vmatpush1.msra.mxu0 0.0
  %1890 = vmatprep.subr.mxu0 0.0
  %1891 = vmatpush1.msra.mxu0 0.0
  %1892 = vmatprep.subr.mxu0 0.0
  %1893 = vmatpush1.msra.mxu0 0.0
  %1894 = vmatprep.subr.mxu0 0.0
  %1895 = vmatpush1.msra.mxu0 0.0
  %1896 = vmatprep.subr.mxu0 0.0
  %1897 = vmatpush1.msra.mxu0 0.0
  %1898 = vmatprep.subr.mxu0 0.0
  %1899 = vmatpush1.msra.mxu0 0.0
  %1900 = vmatprep.subr.mxu0 0.0
  %1901 = vmatpush1.msra.mxu0 0.0
  %1902 = vmatprep.subr.mxu0 0.0
  %1903 = vmatpush1.msra.mxu0 0.0
  %1904 = vmatprep.subr.mxu0 0.0
  %1905 = vmatpush1.msra.mxu0 0.0
  %1906 = vmatprep.subr.mxu0 0.0
  %1907 = vmatpush1.msra.mxu0 0.0
  %1908 = vmatprep.subr.mxu0 0.0
  %1909 = vmatpush1.msra.mxu0 0.0
  %1910 = vmatprep.subr.mxu0 0.0
  %1911 = vmatpush1.msra.mxu0 0.0
  %1912 = vmatprep.subr.mxu0 0.0
  %1913 = vmatpush1.msra.mxu0 0.0
  %1914 = vmatprep.subr.mxu0 0.0
  %1915 = vmatpush1.msra.mxu0 0.0
  %1916 = vmatprep.subr.mxu0 0.0
  %1917 = vmatpush1.msra.mxu0 0.0
  %1918 = vmatprep.subr.mxu0 0.0
  %1919 = vmatpush1.msra.mxu0 0.0
  %1920 = vmatprep.subr.mxu0 0.0
  %1921 = vmatpush1.msra.mxu0 0.0
  %1922 = vmatprep.subr.mxu0 0.0
  %1923 = vmatpush1.msra.mxu0 0.0
  %1924 = vmatprep.subr.mxu0 0.0
  %1925 = vmatpush1.msra.mxu0 0.0
  %1926 = vmatprep.subr.mxu0 0.0
  %1927 = vmatpush1.msra.mxu0 0.0
  %1928 = vmatprep.subr.mxu0 0.0
  %1929 = vmatpush1.msra.mxu0 0.0
  %1930 = vmatprep.subr.mxu0 0.0
  %1931 = vmatpush1.msra.mxu0 0.0
  %1932 = vmatprep.subr.mxu0 0.0
  %1933 = vmatpush1.msra.mxu0 0.0
  %1934 = vmatprep.subr.mxu0 0.0
  %1935 = vmatpush1.msra.mxu0 0.0
  %1936 = vmatprep.subr.mxu0 0.0
  %1937 = vmatpush1.msra.mxu0 0.0
  %1938 = vmatprep.subr.mxu0 0.0
  %1939 = vmatpush1.msra.mxu0 0.0
  %1940 = vmatprep.mubr.f32.mxu0 0.0
  %1941 = vmatmul.mubr.f32.gmra.mrb[0].mxu0 %v1874
  %v1942 = vpop.f32.mrb[0].mxu0
  %v1943 = vadd.f32 %v1869, %v1942
  %v1944 = vpop.f32.mrb[0].mxu0
  %1945 = vdwg.mxu0
  %1946 = vmax.xlane.f32.xlu0 %v1943
  %v1947 = vpop.xlane.xlu0 %1946
  %v1948 = vsub.f32 %v1943, %v1947
  %v1949 = vmul.f32 %v1948, 1.442695
  %v1950 = vpow.pop %v1949
  %1951 = vadd.xlane.f32.xlu0 %v1950
  %v1952 = vpop.xlane.xlu0 %1951
  %v1953 = vlog2.pop %v1952
  %v1954 = vmul.f32 %v1953, 0.6931472
  %v1955 = vadd.f32 %v1947, %v1954
  %v1956 = vsub.f32 %v1943, %v1955
  %1957 = vst [vmem:[%s7] sm:$0xff] %v1956
  // Predicated region
  $region30: #{lstm_try_forward.1} parent=0 // pred_check
    _
  $region31: #{lstm_try_forward.1} parent=0 // pred_check_branch
    %1959 = sbr.rel (0) target = $region33
  $region32: #{lstm_try_forward.1} parent=0 // pred_region
    _
  $region33: #{lstm_try_forward.1} parent=0 // pred_fallthru
    _
  // Predicated region
  $region34: #{lstm_try_forward.1} parent=0 // pred_check
    _
  $region35: #{lstm_try_forward.1} parent=0 // pred_check_branch
    %1961 = sbr.rel (0) target = $region37
  $region36: #{lstm_try_forward.1} parent=0 // pred_region
    _
  $region37: #{lstm_try_forward.1} parent=0 // pred_fallthru
    _

</llo_original>
